<compile_context>
chip_gen: v6e
topology: v6e:2x2x1
jax: 0.10.0
libtpu: 0.0.40
codegen_flags: <defaults>
</compile_context>

<pallas_src>
import functools

import jax
import jax.numpy as jnp
from jax.experimental import pallas as pl
from jax.experimental.pallas import tpu as pltpu


# ---------------------------------------------------------------------------
# Fused SEBottleneck kernel: one batch element per grid step.
# Activations are (C, N) with N = D*H*W on the lane dimension (lane-dense).
# ---------------------------------------------------------------------------
def se_bottleneck_kernel(x_ref, mask_ref, w1_ref, b1_ref, w2_ref, b2_ref,
                         w3_ref, b3_ref, fc1_ref, fc2_ref, o_ref, taps_ref,
                         *, spatial):
    D, H, W = spatial
    N = D * H * W
    planes = w1_ref.shape[0]

    x = x_ref[0]                                             # (Cin, N) f32 -- also the residual

    # ---- conv1 (1x1x1) + bn1 + relu  (bn scale pre-folded into w1) ----------
    y1 = jnp.dot(w1_ref[...], x.astype(jnp.bfloat16),
                 preferred_element_type=jnp.float32)
    y1 = jnp.maximum(y1 + b1_ref[...], 0.0)                  # (planes, N) f32

    # ---- conv2 (3x3x3, stride=1, pad=1) + bn2 + relu -------------------------
    # Stack the 27 neighbour taps (circular lane-rolls of the VMEM-resident y1)
    # into a (27*planes, N) scratch; zero-padding is reproduced by one fused
    # multiply with the precomputed boundary mask; contract with a single
    # (planes, 27*planes) matmul on the MXU (bf16 operands, f32 accumulate).
    t = 0
    for dd in (-1, 0, 1):
        for dh in (-1, 0, 1):
            for dw in (-1, 0, 1):
                off = dd * H * W + dh * W + dw
                tap = y1 if off == 0 else pltpu.roll(y1, shift=(-off) % N, axis=1)
                taps_ref[pl.ds(t * planes, planes), :] = tap
                t += 1
    rhs = (taps_ref[...] * mask_ref[...]).astype(jnp.bfloat16)     # (27*planes, N)
    y2 = jnp.dot(w2_ref[...], rhs, preferred_element_type=jnp.float32)
    y2 = jnp.maximum(y2 + b2_ref[...], 0.0)                  # (planes, N) f32

    # ---- conv3 (1x1x1) + bn3 (no relu) ---------------------------------------
    y3 = jnp.dot(w3_ref[...], y2.astype(jnp.bfloat16),
                 preferred_element_type=jnp.float32) + b3_ref[...]   # (c4, N) f32

    # ---- SE: global avg pool + fc1 -> relu -> fc2 -> sigmoid (VPU/XLU only) ---
    pooled = jnp.mean(y3, axis=1, keepdims=True)                                  # (c4, 1)
    h = jnp.maximum(jnp.sum(fc1_ref[...] * pooled, axis=0, keepdims=True), 0.0)   # (1, cr)
    gate = jax.nn.sigmoid(jnp.sum(fc2_ref[...] * h, axis=1, keepdims=True))       # (c4, 1)

    # ---- channel re-scale + identity residual + final relu -------------------
    o_ref[0] = jnp.maximum(y3 * gate + x, 0.0).astype(o_ref.dtype)


# ---------------------------------------------------------------------------
# Full SEBottleneck forward (stride=1, downsample=None -> identity residual)
# ---------------------------------------------------------------------------
def se_bottleneck_forward(x_ncdhw, p):
    B, Cin, D, H, W = x_ncdhw.shape
    N = D * H * W
    planes = p["w1"].shape[1]
    c4 = p["w3"].shape[1]
    cr = p["wfc1"].shape[1]
    assert Cin == c4  # identity residual (inplanes == planes * expansion)

    # NCDHW -> (B, C, N): a free reshape (channels stay on axis 1; the flattened
    # spatial extent becomes the lane dimension inside the kernel).
    x = x_ncdhw.reshape(B, Cin, N)

    # Fold inference-mode BN scale into channels-first weights (tiny, one-time),
    # cast matmul weights to bf16 (f32 accumulation is kept inside the kernel).
    w1t = (p["w1"].T * p["s1"][:, None]).astype(jnp.bfloat16)             # (planes, Cin)
    w2t = (jnp.transpose(p["w2"], (0, 1, 2, 4, 3)).reshape(27, planes, planes)
           * p["s2"][None, :, None])                                      # (27, Cout, Cin)
    w2s = jnp.transpose(w2t, (1, 0, 2)).reshape(planes, 27 * planes)      # (Cout, 27*Cin)
    w2s = w2s.astype(jnp.bfloat16)
    w3t = (p["w3"].T * p["s3"][:, None]).astype(jnp.bfloat16)             # (c4, planes)
    b1 = p["b1"].reshape(planes, 1)
    b2 = p["b2"].reshape(planes, 1)
    b3 = p["b3"].reshape(c4, 1)
    fc1 = p["wfc1"]                                                        # (c4, cr)
    fc2t = p["wfc2"].T                                                     # (c4, cr)

    # Grid-invariant zero-padding masks for the 27 conv2 taps, precomputed once
    # outside the kernel (keeps iota / div / mod and the boundary compares off
    # the hot path, regardless of whether D/H/W are powers of two).
    idx = jnp.arange(N)
    wp, hp, dp = idx % W, (idx // W) % H, idx // (H * W)
    rows = []
    for dd in (-1, 0, 1):
        for dh in (-1, 0, 1):
            for dw in (-1, 0, 1):
                m = jnp.ones((N,), jnp.bool_)
                if dd == -1: m = m & (dp >= 1)
                if dd == 1:  m = m & (dp < D - 1)
                if dh == -1: m = m & (hp >= 1)
                if dh == 1:  m = m & (hp < H - 1)
                if dw == -1: m = m & (wp >= 1)
                if dw == 1:  m = m & (wp < W - 1)
                rows.append(m)
    mask = jnp.repeat(jnp.stack(rows).astype(jnp.float32), planes, axis=0)  # (27*planes, N)

    out = pl.pallas_call(
        functools.partial(se_bottleneck_kernel, spatial=(D, H, W)),
        out_shape=jax.ShapeDtypeStruct((B, c4, N), jnp.float32),
        grid_spec=pltpu.PrefetchScalarGridSpec(
            num_scalar_prefetch=0,
            grid=(B,),
            in_specs=[
                pl.BlockSpec((1, Cin, N), lambda b: (b, 0, 0)),
                pl.BlockSpec((27 * planes, N), lambda b: (0, 0)),
                pl.BlockSpec((planes, Cin), lambda b: (0, 0)),
                pl.BlockSpec((planes, 1), lambda b: (0, 0)),
                pl.BlockSpec((planes, 27 * planes), lambda b: (0, 0)),
                pl.BlockSpec((planes, 1), lambda b: (0, 0)),
                pl.BlockSpec((c4, planes), lambda b: (0, 0)),
                pl.BlockSpec((c4, 1), lambda b: (0, 0)),
                pl.BlockSpec((c4, cr), lambda b: (0, 0)),
                pl.BlockSpec((c4, cr), lambda b: (0, 0)),
            ],
            out_specs=pl.BlockSpec((1, c4, N), lambda b: (b, 0, 0)),
            scratch_shapes=[pltpu.VMEM((27 * planes, N), jnp.float32)],
        ),
        compiler_params=pltpu.CompilerParams(
            dimension_semantics=("parallel",)),
    )(x, mask, w1t, b1, w2s, b2, w3t, b3, fc1, fc2t)

    return out.reshape(B, c4, D, H, W)


# ---------------------------------------------------------------------------
# Plain-JAX reference for verification
# ---------------------------------------------------------------------------
def reference_forward(x_ncdhw, p):
    hp = jax.lax.Precision.HIGHEST
    x = jnp.transpose(x_ncdhw, (0, 2, 3, 4, 1))
    y = jnp.einsum("bdhwc,cf->bdhwf", x, p["w1"], precision=hp)
    y = jnp.maximum(y * p["s1"] + p["b1"], 0.0)
    y = jax.lax.conv_general_dilated(
        y, p["w2"], window_strides=(1, 1, 1), padding=[(1, 1)] * 3,
        dimension_numbers=("NDHWC", "DHWIO", "NDHWC"), precision=hp)
    y = jnp.maximum(y * p["s2"] + p["b2"], 0.0)
    y = jnp.einsum("bdhwc,cf->bdhwf", y, p["w3"], precision=hp)
    y = y * p["s3"] + p["b3"]
    pooled = jnp.mean(y, axis=(1, 2, 3))
    gate = jax.nn.sigmoid(jnp.maximum(pooled @ p["wfc1"], 0.0) @ p["wfc2"])
    out = jnp.maximum(y * gate[:, None, None, None, :] + x, 0.0)
    return jnp.transpose(out, (0, 4, 1, 2, 3))


if __name__ == "__main__":
    # SEBottleneck(inplanes=16, planes=4) with identity residual:
    # inplanes == planes * expansion (=4), stride=1, downsample=None.
    B, planes, reduction = 2, 4, 16
    c4 = planes * 4                   # = 16 = inplanes
    D = H = W = 8
    eps = 1e-5

    key = jax.random.PRNGKey(0)
    ks = jax.random.split(key, 6)
    x_ncdhw = jax.random.normal(ks[0], (B, c4, D, H, W), jnp.float32)

    def bn_fold(c):
        gamma = jnp.ones((c,), jnp.float32)
        beta = jnp.zeros((c,), jnp.float32)
        mean = jnp.zeros((c,), jnp.float32)
        var = jnp.ones((c,), jnp.float32)
        scale = gamma / jnp.sqrt(var + eps)
        return scale, beta - mean * scale

    s1, b1 = bn_fold(planes)
    s2, b2 = bn_fold(planes)
    s3, b3 = bn_fold(c4)

    params = dict(
        w1=0.1 * jax.random.normal(ks[1], (c4, planes), jnp.float32),
        w2=0.1 * jax.random.normal(ks[2], (3, 3, 3, planes, planes), jnp.float32),
        w3=0.1 * jax.random.normal(ks[3], (planes, c4), jnp.float32),
        wfc1=0.1 * jax.random.normal(ks[4], (c4, c4 // reduction), jnp.float32),
        wfc2=0.1 * jax.random.normal(ks[5], (c4 // reduction, c4), jnp.float32),
        s1=s1, b1=b1, s2=s2, b2=b2, s3=s3, b3=b3,
    )

    out = jax.block_until_ready(
        jax.jit(se_bottleneck_forward)(x_ncdhw, params))
    ref = jax.block_until_ready(
        jax.jit(reference_forward)(x_ncdhw, params))

    assert out.shape == (B, c4, D, H, W), out.shape
    # bf16-at-dot (f32 accumulate) widens the error slightly vs. the f32 HIGHEST
    # reference; 1e-2 gives comfortable headroom (measured error is ~1e-3).
    if not jnp.allclose(out, ref, atol=1e-2, rtol=1e-2):
        raise AssertionError(
            f"mismatch: max abs err = {float(jnp.max(jnp.abs(out - ref)))}")
    print("KERNEL_OK")
</pallas_src>

<mosaic_0001>
module attributes {stable_mosaic.version = 11 : i64} {
  func.func @se_bottleneck_kernel(%arg0: i32, %arg1: memref<1x16x512xf32, #tpu.memory_space<vmem>>, %arg2: memref<108x512xf32, #tpu.memory_space<vmem>>, %arg3: memref<4x16xbf16, #tpu.memory_space<vmem>>, %arg4: memref<4x1xf32, #tpu.memory_space<vmem>>, %arg5: memref<4x108xbf16, #tpu.memory_space<vmem>>, %arg6: memref<4x1xf32, #tpu.memory_space<vmem>>, %arg7: memref<16x4xbf16, #tpu.memory_space<vmem>>, %arg8: memref<16x1xf32, #tpu.memory_space<vmem>>, %arg9: memref<16x1xf32, #tpu.memory_space<vmem>>, %arg10: memref<16x1xf32, #tpu.memory_space<vmem>>, %arg11: memref<1x16x512xf32, #tpu.memory_space<vmem>>, %arg12: memref<108x512xf32, #tpu.memory_space<vmem>>) attributes {dimension_semantics = [#tpu.dimension_semantics<parallel>], iteration_bounds = array<i64: 2>, scalar_prefetch = 0 : i64, scratch_operands = 1 : i64, tpu.core_type = #tpu.core_type<tc>, window_params = [{transform_indices = @transform_0, window_bounds = array<i64: 1, 16, 512>}, {pipeline_mode = #tpu.pipeline_mode<synchronous>, transform_indices = @transform_1, window_bounds = array<i64: 108, 512>}, {pipeline_mode = #tpu.pipeline_mode<synchronous>, transform_indices = @transform_2, window_bounds = array<i64: 4, 16>}, {pipeline_mode = #tpu.pipeline_mode<synchronous>, transform_indices = @transform_3, window_bounds = array<i64: 4, 1>}, {pipeline_mode = #tpu.pipeline_mode<synchronous>, transform_indices = @transform_4, window_bounds = array<i64: 4, 108>}, {pipeline_mode = #tpu.pipeline_mode<synchronous>, transform_indices = @transform_5, window_bounds = array<i64: 4, 1>}, {pipeline_mode = #tpu.pipeline_mode<synchronous>, transform_indices = @transform_6, window_bounds = array<i64: 16, 4>}, {pipeline_mode = #tpu.pipeline_mode<synchronous>, transform_indices = @transform_7, window_bounds = array<i64: 16, 1>}, {pipeline_mode = #tpu.pipeline_mode<synchronous>, transform_indices = @transform_8, window_bounds = array<i64: 16, 1>}, {pipeline_mode = #tpu.pipeline_mode<synchronous>, transform_indices = @transform_9, window_bounds = array<i64: 16, 1>}, {transform_indices = @transform_10, window_bounds = array<i64: 1, 16, 512>}]} {
    %c0 = arith.constant 0 : index
    %c0_0 = arith.constant 0 : index
    %c0_1 = arith.constant 0 : index
    %0 = vector.load %arg1[%c0, %c0_0, %c0_1] : memref<1x16x512xf32, #tpu.memory_space<vmem>>, vector<1x16x512xf32>
    %1 = vector.shape_cast %0 : vector<1x16x512xf32> to vector<16x512xf32>
    %c0_2 = arith.constant 0 : index
    %c0_3 = arith.constant 0 : index
    %2 = vector.load %arg3[%c0_2, %c0_3] : memref<4x16xbf16, #tpu.memory_space<vmem>>, vector<4x16xbf16>
    %3 = arith.truncf %1 : vector<16x512xf32> to vector<16x512xbf16>
    %cst = arith.constant dense<0.000000e+00> : vector<4x512xf32>
    %4 = tpu.matmul %2, %3, %cst {dimension_numbers = #tpu.dot_dimension_numbers<[1], [0], [0], [1], [0, 0, 1, 1], [], []>} : vector<4x16xbf16>, vector<16x512xbf16>, vector<4x512xf32> -> vector<4x512xf32>
    %c0_4 = arith.constant 0 : index
    %c0_5 = arith.constant 0 : index
    %5 = vector.load %arg4[%c0_4, %c0_5] : memref<4x1xf32, #tpu.memory_space<vmem>>, vector<4x1xf32>
    %6 = vector.broadcast %5 : vector<4x1xf32> to vector<4x512xf32>
    %7 = arith.addf %4, %6 : vector<4x512xf32>
    %cst_6 = arith.constant 0.000000e+00 : f32
    %8 = vector.broadcast %cst_6 : f32 to vector<4x512xf32>
    %9 = arith.maximumf %7, %8 : vector<4x512xf32>
    %c73_i32 = arith.constant 73 : i32
    %10 = tpu.dynamic_rotate %9 by %c73_i32 dim 1 : vector<4x512xf32>, i32 -> vector<4x512xf32>
    %c0_7 = arith.constant 0 : index
    %c0_8 = arith.constant 0 : index
    %11 = vector.load %arg12[%c0_7, %c0_8] : memref<108x512xf32, #tpu.memory_space<vmem>>, vector<4x512xf32>
    tpu.vector_store %arg12[%c0_7, %c0_8], %10 {strides = array<i32>} : memref<108x512xf32, #tpu.memory_space<vmem>>, vector<4x512xf32>,
    %c72_i32 = arith.constant 72 : i32
    %12 = tpu.dynamic_rotate %9 by %c72_i32 dim 1 : vector<4x512xf32>, i32 -> vector<4x512xf32>
    %c4 = arith.constant 4 : index
    %c0_9 = arith.constant 0 : index
    %13 = vector.load %arg12[%c4, %c0_9] : memref<108x512xf32, #tpu.memory_space<vmem>>, vector<4x512xf32>
    tpu.vector_store %arg12[%c4, %c0_9], %12 {strides = array<i32>} : memref<108x512xf32, #tpu.memory_space<vmem>>, vector<4x512xf32>,
    %c71_i32 = arith.constant 71 : i32
    %14 = tpu.dynamic_rotate %9 by %c71_i32 dim 1 : vector<4x512xf32>, i32 -> vector<4x512xf32>
    %c8 = arith.constant 8 : index
    %c0_10 = arith.constant 0 : index
    %15 = vector.load %arg12[%c8, %c0_10] : memref<108x512xf32, #tpu.memory_space<vmem>>, vector<4x512xf32>
    tpu.vector_store %arg12[%c8, %c0_10], %14 {strides = array<i32>} : memref<108x512xf32, #tpu.memory_space<vmem>>, vector<4x512xf32>,
    %c65_i32 = arith.constant 65 : i32
    %16 = tpu.dynamic_rotate %9 by %c65_i32 dim 1 : vector<4x512xf32>, i32 -> vector<4x512xf32>
    %c12 = arith.constant 12 : index
    %c0_11 = arith.constant 0 : index
    %17 = vector.load %arg12[%c12, %c0_11] : memref<108x512xf32, #tpu.memory_space<vmem>>, vector<4x512xf32>
    tpu.vector_store %arg12[%c12, %c0_11], %16 {strides = array<i32>} : memref<108x512xf32, #tpu.memory_space<vmem>>, vector<4x512xf32>,
    %c64_i32 = arith.constant 64 : i32
    %18 = tpu.dynamic_rotate %9 by %c64_i32 dim 1 : vector<4x512xf32>, i32 -> vector<4x512xf32>
    %c16 = arith.constant 16 : index
    %c0_12 = arith.constant 0 : index
    %19 = vector.load %arg12[%c16, %c0_12] : memref<108x512xf32, #tpu.memory_space<vmem>>, vector<4x512xf32>
    tpu.vector_store %arg12[%c16, %c0_12], %18 {strides = array<i32>} : memref<108x512xf32, #tpu.memory_space<vmem>>, vector<4x512xf32>,
    %c63_i32 = arith.constant 63 : i32
    %20 = tpu.dynamic_rotate %9 by %c63_i32 dim 1 : vector<4x512xf32>, i32 -> vector<4x512xf32>
    %c20 = arith.constant 20 : index
    %c0_13 = arith.constant 0 : index
    %21 = vector.load %arg12[%c20, %c0_13] : memref<108x512xf32, #tpu.memory_space<vmem>>, vector<4x512xf32>
    tpu.vector_store %arg12[%c20, %c0_13], %20 {strides = array<i32>} : memref<108x512xf32, #tpu.memory_space<vmem>>, vector<4x512xf32>,
    %c57_i32 = arith.constant 57 : i32
    %22 = tpu.dynamic_rotate %9 by %c57_i32 dim 1 : vector<4x512xf32>, i32 -> vector<4x512xf32>
    %c24 = arith.constant 24 : index
    %c0_14 = arith.constant 0 : index
    %23 = vector.load %arg12[%c24, %c0_14] : memref<108x512xf32, #tpu.memory_space<vmem>>, vector<4x512xf32>
    tpu.vector_store %arg12[%c24, %c0_14], %22 {strides = array<i32>} : memref<108x512xf32, #tpu.memory_space<vmem>>, vector<4x512xf32>,
    %c56_i32 = arith.constant 56 : i32
    %24 = tpu.dynamic_rotate %9 by %c56_i32 dim 1 : vector<4x512xf32>, i32 -> vector<4x512xf32>
    %c28 = arith.constant 28 : index
    %c0_15 = arith.constant 0 : index
    %25 = vector.load %arg12[%c28, %c0_15] : memref<108x512xf32, #tpu.memory_space<vmem>>, vector<4x512xf32>
    tpu.vector_store %arg12[%c28, %c0_15], %24 {strides = array<i32>} : memref<108x512xf32, #tpu.memory_space<vmem>>, vector<4x512xf32>,
    %c55_i32 = arith.constant 55 : i32
    %26 = tpu.dynamic_rotate %9 by %c55_i32 dim 1 : vector<4x512xf32>, i32 -> vector<4x512xf32>
    %c32 = arith.constant 32 : index
    %c0_16 = arith.constant 0 : index
    %27 = vector.load %arg12[%c32, %c0_16] : memref<108x512xf32, #tpu.memory_space<vmem>>, vector<4x512xf32>
    tpu.vector_store %arg12[%c32, %c0_16], %26 {strides = array<i32>} : memref<108x512xf32, #tpu.memory_space<vmem>>, vector<4x512xf32>,
    %c9_i32 = arith.constant 9 : i32
    %28 = tpu.dynamic_rotate %9 by %c9_i32 dim 1 : vector<4x512xf32>, i32 -> vector<4x512xf32>
    %c36 = arith.constant 36 : index
    %c0_17 = arith.constant 0 : index
    %29 = vector.load %arg12[%c36, %c0_17] : memref<108x512xf32, #tpu.memory_space<vmem>>, vector<4x512xf32>
    tpu.vector_store %arg12[%c36, %c0_17], %28 {strides = array<i32>} : memref<108x512xf32, #tpu.memory_space<vmem>>, vector<4x512xf32>,
    %c8_i32 = arith.constant 8 : i32
    %30 = tpu.dynamic_rotate %9 by %c8_i32 dim 1 : vector<4x512xf32>, i32 -> vector<4x512xf32>
    %c40 = arith.constant 40 : index
    %c0_18 = arith.constant 0 : index
    %31 = vector.load %arg12[%c40, %c0_18] : memref<108x512xf32, #tpu.memory_space<vmem>>, vector<4x512xf32>
    tpu.vector_store %arg12[%c40, %c0_18], %30 {strides = array<i32>} : memref<108x512xf32, #tpu.memory_space<vmem>>, vector<4x512xf32>,
    %c7_i32 = arith.constant 7 : i32
    %32 = tpu.dynamic_rotate %9 by %c7_i32 dim 1 : vector<4x512xf32>, i32 -> vector<4x512xf32>
    %c44 = arith.constant 44 : index
    %c0_19 = arith.constant 0 : index
    %33 = vector.load %arg12[%c44, %c0_19] : memref<108x512xf32, #tpu.memory_space<vmem>>, vector<4x512xf32>
    tpu.vector_store %arg12[%c44, %c0_19], %32 {strides = array<i32>} : memref<108x512xf32, #tpu.memory_space<vmem>>, vector<4x512xf32>,
    %c1_i32 = arith.constant 1 : i32
    %34 = tpu.dynamic_rotate %9 by %c1_i32 dim 1 : vector<4x512xf32>, i32 -> vector<4x512xf32>
    %c48 = arith.constant 48 : index
    %c0_20 = arith.constant 0 : index
    %35 = vector.load %arg12[%c48, %c0_20] : memref<108x512xf32, #tpu.memory_space<vmem>>, vector<4x512xf32>
    tpu.vector_store %arg12[%c48, %c0_20], %34 {strides = array<i32>} : memref<108x512xf32, #tpu.memory_space<vmem>>, vector<4x512xf32>,
    %c52 = arith.constant 52 : index
    %c0_21 = arith.constant 0 : index
    %36 = vector.load %arg12[%c52, %c0_21] : memref<108x512xf32, #tpu.memory_space<vmem>>, vector<4x512xf32>
    tpu.vector_store %arg12[%c52, %c0_21], %9 {strides = array<i32>} : memref<108x512xf32, #tpu.memory_space<vmem>>, vector<4x512xf32>,
    %c511_i32 = arith.constant 511 : i32
    %37 = tpu.dynamic_rotate %9 by %c511_i32 dim 1 : vector<4x512xf32>, i32 -> vector<4x512xf32>
    %c56 = arith.constant 56 : index
    %c0_22 = arith.constant 0 : index
    %38 = vector.load %arg12[%c56, %c0_22] : memref<108x512xf32, #tpu.memory_space<vmem>>, vector<4x512xf32>
    tpu.vector_store %arg12[%c56, %c0_22], %37 {strides = array<i32>} : memref<108x512xf32, #tpu.memory_space<vmem>>, vector<4x512xf32>,
    %c505_i32 = arith.constant 505 : i32
    %39 = tpu.dynamic_rotate %9 by %c505_i32 dim 1 : vector<4x512xf32>, i32 -> vector<4x512xf32>
    %c60 = arith.constant 60 : index
    %c0_23 = arith.constant 0 : index
    %40 = vector.load %arg12[%c60, %c0_23] : memref<108x512xf32, #tpu.memory_space<vmem>>, vector<4x512xf32>
    tpu.vector_store %arg12[%c60, %c0_23], %39 {strides = array<i32>} : memref<108x512xf32, #tpu.memory_space<vmem>>, vector<4x512xf32>,
    %c504_i32 = arith.constant 504 : i32
    %41 = tpu.dynamic_rotate %9 by %c504_i32 dim 1 : vector<4x512xf32>, i32 -> vector<4x512xf32>
    %c64 = arith.constant 64 : index
    %c0_24 = arith.constant 0 : index
    %42 = vector.load %arg12[%c64, %c0_24] : memref<108x512xf32, #tpu.memory_space<vmem>>, vector<4x512xf32>
    tpu.vector_store %arg12[%c64, %c0_24], %41 {strides = array<i32>} : memref<108x512xf32, #tpu.memory_space<vmem>>, vector<4x512xf32>,
    %c503_i32 = arith.constant 503 : i32
    %43 = tpu.dynamic_rotate %9 by %c503_i32 dim 1 : vector<4x512xf32>, i32 -> vector<4x512xf32>
    %c68 = arith.constant 68 : index
    %c0_25 = arith.constant 0 : index
    %44 = vector.load %arg12[%c68, %c0_25] : memref<108x512xf32, #tpu.memory_space<vmem>>, vector<4x512xf32>
    tpu.vector_store %arg12[%c68, %c0_25], %43 {strides = array<i32>} : memref<108x512xf32, #tpu.memory_space<vmem>>, vector<4x512xf32>,
    %c457_i32 = arith.constant 457 : i32
    %45 = tpu.dynamic_rotate %9 by %c457_i32 dim 1 : vector<4x512xf32>, i32 -> vector<4x512xf32>
    %c72 = arith.constant 72 : index
    %c0_26 = arith.constant 0 : index
    %46 = vector.load %arg12[%c72, %c0_26] : memref<108x512xf32, #tpu.memory_space<vmem>>, vector<4x512xf32>
    tpu.vector_store %arg12[%c72, %c0_26], %45 {strides = array<i32>} : memref<108x512xf32, #tpu.memory_space<vmem>>, vector<4x512xf32>,
    %c456_i32 = arith.constant 456 : i32
    %47 = tpu.dynamic_rotate %9 by %c456_i32 dim 1 : vector<4x512xf32>, i32 -> vector<4x512xf32>
    %c76 = arith.constant 76 : index
    %c0_27 = arith.constant 0 : index
    %48 = vector.load %arg12[%c76, %c0_27] : memref<108x512xf32, #tpu.memory_space<vmem>>, vector<4x512xf32>
    tpu.vector_store %arg12[%c76, %c0_27], %47 {strides = array<i32>} : memref<108x512xf32, #tpu.memory_space<vmem>>, vector<4x512xf32>,
    %c455_i32 = arith.constant 455 : i32
    %49 = tpu.dynamic_rotate %9 by %c455_i32 dim 1 : vector<4x512xf32>, i32 -> vector<4x512xf32>
    %c80 = arith.constant 80 : index
    %c0_28 = arith.constant 0 : index
    %50 = vector.load %arg12[%c80, %c0_28] : memref<108x512xf32, #tpu.memory_space<vmem>>, vector<4x512xf32>
    tpu.vector_store %arg12[%c80, %c0_28], %49 {strides = array<i32>} : memref<108x512xf32, #tpu.memory_space<vmem>>, vector<4x512xf32>,
    %c449_i32 = arith.constant 449 : i32
    %51 = tpu.dynamic_rotate %9 by %c449_i32 dim 1 : vector<4x512xf32>, i32 -> vector<4x512xf32>
    %c84 = arith.constant 84 : index
    %c0_29 = arith.constant 0 : index
    %52 = vector.load %arg12[%c84, %c0_29] : memref<108x512xf32, #tpu.memory_space<vmem>>, vector<4x512xf32>
    tpu.vector_store %arg12[%c84, %c0_29], %51 {strides = array<i32>} : memref<108x512xf32, #tpu.memory_space<vmem>>, vector<4x512xf32>,
    %c448_i32 = arith.constant 448 : i32
    %53 = tpu.dynamic_rotate %9 by %c448_i32 dim 1 : vector<4x512xf32>, i32 -> vector<4x512xf32>
    %c88 = arith.constant 88 : index
    %c0_30 = arith.constant 0 : index
    %54 = vector.load %arg12[%c88, %c0_30] : memref<108x512xf32, #tpu.memory_space<vmem>>, vector<4x512xf32>
    tpu.vector_store %arg12[%c88, %c0_30], %53 {strides = array<i32>} : memref<108x512xf32, #tpu.memory_space<vmem>>, vector<4x512xf32>,
    %c447_i32 = arith.constant 447 : i32
    %55 = tpu.dynamic_rotate %9 by %c447_i32 dim 1 : vector<4x512xf32>, i32 -> vector<4x512xf32>
    %c92 = arith.constant 92 : index
    %c0_31 = arith.constant 0 : index
    %56 = vector.load %arg12[%c92, %c0_31] : memref<108x512xf32, #tpu.memory_space<vmem>>, vector<4x512xf32>
    tpu.vector_store %arg12[%c92, %c0_31], %55 {strides = array<i32>} : memref<108x512xf32, #tpu.memory_space<vmem>>, vector<4x512xf32>,
    %c441_i32 = arith.constant 441 : i32
    %57 = tpu.dynamic_rotate %9 by %c441_i32 dim 1 : vector<4x512xf32>, i32 -> vector<4x512xf32>
    %c96 = arith.constant 96 : index
    %c0_32 = arith.constant 0 : index
    %58 = vector.load %arg12[%c96, %c0_32] : memref<108x512xf32, #tpu.memory_space<vmem>>, vector<4x512xf32>
    tpu.vector_store %arg12[%c96, %c0_32], %57 {strides = array<i32>} : memref<108x512xf32, #tpu.memory_space<vmem>>, vector<4x512xf32>,
    %c440_i32 = arith.constant 440 : i32
    %59 = tpu.dynamic_rotate %9 by %c440_i32 dim 1 : vector<4x512xf32>, i32 -> vector<4x512xf32>
    %c100 = arith.constant 100 : index
    %c0_33 = arith.constant 0 : index
    %60 = vector.load %arg12[%c100, %c0_33] : memref<108x512xf32, #tpu.memory_space<vmem>>, vector<4x512xf32>
    tpu.vector_store %arg12[%c100, %c0_33], %59 {strides = array<i32>} : memref<108x512xf32, #tpu.memory_space<vmem>>, vector<4x512xf32>,
    %c439_i32 = arith.constant 439 : i32
    %61 = tpu.dynamic_rotate %9 by %c439_i32 dim 1 : vector<4x512xf32>, i32 -> vector<4x512xf32>
    %c104 = arith.constant 104 : index
    %c0_34 = arith.constant 0 : index
    %62 = vector.load %arg12[%c104, %c0_34] : memref<108x512xf32, #tpu.memory_space<vmem>>, vector<4x512xf32>
    tpu.vector_store %arg12[%c104, %c0_34], %61 {strides = array<i32>} : memref<108x512xf32, #tpu.memory_space<vmem>>, vector<4x512xf32>,
    %c0_35 = arith.constant 0 : index
    %c0_36 = arith.constant 0 : index
    %63 = vector.load %arg12[%c0_35, %c0_36] : memref<108x512xf32, #tpu.memory_space<vmem>>, vector<108x512xf32>
    %c0_37 = arith.constant 0 : index
    %c0_38 = arith.constant 0 : index
    %64 = vector.load %arg2[%c0_37, %c0_38] : memref<108x512xf32, #tpu.memory_space<vmem>>, vector<108x512xf32>
    %65 = arith.mulf %63, %64 : vector<108x512xf32>
    %66 = arith.truncf %65 : vector<108x512xf32> to vector<108x512xbf16>
    %c0_39 = arith.constant 0 : index
    %c0_40 = arith.constant 0 : index
    %67 = vector.load %arg5[%c0_39, %c0_40] : memref<4x108xbf16, #tpu.memory_space<vmem>>, vector<4x108xbf16>
    %cst_41 = arith.constant dense<0.000000e+00> : vector<4x512xf32>
    %68 = tpu.matmul %67, %66, %cst_41 {dimension_numbers = #tpu.dot_dimension_numbers<[1], [0], [0], [1], [0, 0, 1, 1], [], []>} : vector<4x108xbf16>, vector<108x512xbf16>, vector<4x512xf32> -> vector<4x512xf32>
    %c0_42 = arith.constant 0 : index
    %c0_43 = arith.constant 0 : index
    %69 = vector.load %arg6[%c0_42, %c0_43] : memref<4x1xf32, #tpu.memory_space<vmem>>, vector<4x1xf32>
    %70 = vector.broadcast %69 : vector<4x1xf32> to vector<4x512xf32>
    %71 = arith.addf %68, %70 : vector<4x512xf32>
    %cst_44 = arith.constant 0.000000e+00 : f32
    %72 = vector.broadcast %cst_44 : f32 to vector<4x512xf32>
    %73 = arith.maximumf %71, %72 : vector<4x512xf32>
    %c0_45 = arith.constant 0 : index
    %c0_46 = arith.constant 0 : index
    %74 = vector.load %arg7[%c0_45, %c0_46] : memref<16x4xbf16, #tpu.memory_space<vmem>>, vector<16x4xbf16>
    %75 = arith.truncf %73 : vector<4x512xf32> to vector<4x512xbf16>
    %cst_47 = arith.constant dense<0.000000e+00> : vector<16x512xf32>
    %76 = tpu.matmul %74, %75, %cst_47 {dimension_numbers = #tpu.dot_dimension_numbers<[1], [0], [0], [1], [0, 0, 1, 1], [], []>} : vector<16x4xbf16>, vector<4x512xbf16>, vector<16x512xf32> -> vector<16x512xf32>
    %c0_48 = arith.constant 0 : index
    %c0_49 = arith.constant 0 : index
    %77 = vector.load %arg8[%c0_48, %c0_49] : memref<16x1xf32, #tpu.memory_space<vmem>>, vector<16x1xf32>
    %78 = vector.broadcast %77 : vector<16x1xf32> to vector<16x512xf32>
    %79 = arith.addf %76, %78 : vector<16x512xf32>
    %cst_50 = arith.constant dense<0.000000e+00> : vector<16xf32>
    %80 = vector.multi_reduction <add>, %79, %cst_50 [1] : vector<16x512xf32> to vector<16xf32>
    %81 = vector.shape_cast %80 : vector<16xf32> to vector<16x1xf32>
    %cst_51 = arith.constant 5.120000e+02 : f32
    %82 = vector.broadcast %cst_51 : f32 to vector<16x1xf32>
    %83 = arith.divf %81, %82 : vector<16x1xf32>
    %c0_52 = arith.constant 0 : index
    %c0_53 = arith.constant 0 : index
    %84 = vector.load %arg9[%c0_52, %c0_53] : memref<16x1xf32, #tpu.memory_space<vmem>>, vector<16x1xf32>
    %85 = arith.mulf %84, %83 : vector<16x1xf32>
    %cst_54 = arith.constant dense<0.000000e+00> : vector<1xf32>
    %86 = vector.multi_reduction <add>, %85, %cst_54 [0] : vector<16x1xf32> to vector<1xf32>
    %87 = vector.shape_cast %86 : vector<1xf32> to vector<1x1xf32>
    %cst_55 = arith.constant 0.000000e+00 : f32
    %88 = vector.broadcast %cst_55 : f32 to vector<1x1xf32>
    %89 = arith.maximumf %87, %88 : vector<1x1xf32>
    %c0_56 = arith.constant 0 : index
    %c0_57 = arith.constant 0 : index
    %90 = vector.load %arg10[%c0_56, %c0_57] : memref<16x1xf32, #tpu.memory_space<vmem>>, vector<16x1xf32>
    %91 = vector.broadcast %89 : vector<1x1xf32> to vector<16x1xf32>
    %92 = arith.mulf %90, %91 : vector<16x1xf32>
    %cst_58 = arith.constant dense<0.000000e+00> : vector<16xf32>
    %93 = vector.multi_reduction <add>, %92, %cst_58 [1] : vector<16x1xf32> to vector<16xf32>
    %94 = vector.shape_cast %93 : vector<16xf32> to vector<16x1xf32>
    %95 = arith.negf %94 : vector<16x1xf32>
    %96 = math.exp %95 : vector<16x1xf32>
    %cst_59 = arith.constant 1.000000e+00 : f32
    %97 = vector.broadcast %cst_59 : f32 to vector<16x1xf32>
    %98 = arith.addf %97, %96 : vector<16x1xf32>
    %99 = arith.divf %97, %98 : vector<16x1xf32>
    %100 = vector.broadcast %99 : vector<16x1xf32> to vector<16x512xf32>
    %101 = arith.mulf %79, %100 : vector<16x512xf32>
    %102 = arith.addf %101, %1 : vector<16x512xf32>
    %cst_60 = arith.constant 0.000000e+00 : f32
    %103 = vector.broadcast %cst_60 : f32 to vector<16x512xf32>
    %104 = arith.maximumf %102, %103 : vector<16x512xf32>
    %c0_61 = arith.constant 0 : index
    %c0_62 = arith.constant 0 : index
    %c0_63 = arith.constant 0 : index
    %105 = vector.load %arg11[%c0_61, %c0_62, %c0_63] : memref<1x16x512xf32, #tpu.memory_space<vmem>>, vector<1x16x512xf32>
    %106 = vector.shape_cast %105 : vector<1x16x512xf32> to vector<16x512xf32>
    %107 = vector.shape_cast %104 : vector<16x512xf32> to vector<1x16x512xf32>
    tpu.vector_store %arg11[%c0_61, %c0_62, %c0_63], %107 {strides = array<i32>} : memref<1x16x512xf32, #tpu.memory_space<vmem>>, vector<1x16x512xf32>,
    return
  }
  func.func @transform_0(%arg0: i32) -> (i32, i32, i32) {
    %c0_i32 = arith.constant 0 : i32
    %c0_i32_0 = arith.constant 0 : i32
    %c0_i32_1 = arith.constant 0 : i32
    return %arg0, %c0_i32, %c0_i32_0 : i32, i32, i32
  }
  func.func @transform_1(%arg0: i32) -> (i32, i32) {
    %c0_i32 = arith.constant 0 : i32
    %c0_i32_0 = arith.constant 0 : i32
    %c0_i32_1 = arith.constant 0 : i32
    return %c0_i32, %c0_i32_0 : i32, i32
  }
  func.func @transform_2(%arg0: i32) -> (i32, i32) {
    %c0_i32 = arith.constant 0 : i32
    %c0_i32_0 = arith.constant 0 : i32
    %c0_i32_1 = arith.constant 0 : i32
    return %c0_i32, %c0_i32_0 : i32, i32
  }
  func.func @transform_3(%arg0: i32) -> (i32, i32) {
    %c0_i32 = arith.constant 0 : i32
    %c0_i32_0 = arith.constant 0 : i32
    %c0_i32_1 = arith.constant 0 : i32
    return %c0_i32, %c0_i32_0 : i32, i32
  }
  func.func @transform_4(%arg0: i32) -> (i32, i32) {
    %c0_i32 = arith.constant 0 : i32
    %c0_i32_0 = arith.constant 0 : i32
    %c0_i32_1 = arith.constant 0 : i32
    return %c0_i32, %c0_i32_0 : i32, i32
  }
  func.func @transform_5(%arg0: i32) -> (i32, i32) {
    %c0_i32 = arith.constant 0 : i32
    %c0_i32_0 = arith.constant 0 : i32
    %c0_i32_1 = arith.constant 0 : i32
    return %c0_i32, %c0_i32_0 : i32, i32
  }
  func.func @transform_6(%arg0: i32) -> (i32, i32) {
    %c0_i32 = arith.constant 0 : i32
    %c0_i32_0 = arith.constant 0 : i32
    %c0_i32_1 = arith.constant 0 : i32
    return %c0_i32, %c0_i32_0 : i32, i32
  }
  func.func @transform_7(%arg0: i32) -> (i32, i32) {
    %c0_i32 = arith.constant 0 : i32
    %c0_i32_0 = arith.constant 0 : i32
    %c0_i32_1 = arith.constant 0 : i32
    return %c0_i32, %c0_i32_0 : i32, i32
  }
  func.func @transform_8(%arg0: i32) -> (i32, i32) {
    %c0_i32 = arith.constant 0 : i32
    %c0_i32_0 = arith.constant 0 : i32
    %c0_i32_1 = arith.constant 0 : i32
    return %c0_i32, %c0_i32_0 : i32, i32
  }
  func.func @transform_9(%arg0: i32) -> (i32, i32) {
    %c0_i32 = arith.constant 0 : i32
    %c0_i32_0 = arith.constant 0 : i32
    %c0_i32_1 = arith.constant 0 : i32
    return %c0_i32, %c0_i32_0 : i32, i32
  }
  func.func @transform_10(%arg0: i32) -> (i32, i32, i32) {
    %c0_i32 = arith.constant 0 : i32
    %c0_i32_0 = arith.constant 0 : i32
    %c0_i32_1 = arith.constant 0 : i32
    return %arg0, %c0_i32, %c0_i32_0 : i32, i32, i32
  }
}

</mosaic_0001>

<llo_original>
// kernel: se_bottleneck_forward.1
$region0: #{se_bottleneck_forward.1}
  #allocation0 [shape = 'u32[]', space=smem, size = 0x4, offset = 0x4, fixed_abs, tag = 'smem constant byte address 0x4 - core index']
  #allocation1 [shape = 'u32[144,128]{1,0:T(1,128)}', space=vmem, size = 0x12000, scoped, tag = 'internal scratch']
  #allocation2 [shape = 'f32[108,512]{1,0:T(8,128)}', space=vmem, size = 0x38000, scoped, tag = 'scratch operand']
  %s0 = inlined_call_operand.vmem [shape: f32[2,16,512], index: 0, kind: input, shape index: {}]
  %s1 = inlined_call_operand.vmem [shape: f32[108,512], index: 1, kind: input, shape index: {}]
  %s2 = inlined_call_operand.vmem [shape: bf16[4,16], index: 2, kind: input, shape index: {}]
  %s3 = inlined_call_operand.vmem [shape: f32[4,1], index: 3, kind: input, shape index: {}]
  %s4 = inlined_call_operand.vmem [shape: bf16[4,108], index: 4, kind: input, shape index: {}]
  %s5 = inlined_call_operand.vmem [shape: f32[4,1], index: 5, kind: input, shape index: {}]
  %s6 = inlined_call_operand.vmem [shape: bf16[16,4], index: 6, kind: input, shape index: {}]
  %s7 = inlined_call_operand.vmem [shape: f32[16,1], index: 7, kind: input, shape index: {}]
  %s8 = inlined_call_operand.vmem [shape: f32[16,1], index: 8, kind: input, shape index: {}]
  %s9 = inlined_call_operand.vmem [shape: f32[16,1], index: 9, kind: input, shape index: {}]
  %s10 = inlined_call_operand.vmem [shape: f32[2,16,512], index: 10, kind: output, shape index: {}]
  %s11 = sld [smem:[#allocation0]]
  $region73: #{se_bottleneck_forward.1} parent=0
    _
  %s13 = ssub.s32 1, %s11
  %s14 = scalar_select 0, %s13, %s11
  loop: start=0, step=1, limit=4
  $region2: #{se_bottleneck_forward.1} parent=0 // loop_pre_header
    _
  $region3: #{se_bottleneck_forward.1} parent=0 // loop_header
    %s16 = sphi 0, %s20
    %p17 = scmp.ge.s32.totalorder %s16, 4
    %s26 = sphi 0, %s28
    %s29 = sphi 0, %s26
    %s30 = sphi 0, %s29
    %s46 = sphi 0, %s30
    %s50 = sphi 0, %s50
    %s52 = sphi 0, %s50
    %s53 = sphi 0, %s52
    %s67 = sphi 0, %s53
    %s71 = sphi 0, %s71
    %s73 = sphi 0, %s71
    %s74 = sphi 0, %s73
    %s88 = sphi 0, %s74
    %s92 = sphi 0, %s92
    %s94 = sphi 0, %s92
    %s95 = sphi 0, %s94
    %s109 = sphi 0, %s95
    %s113 = sphi 0, %s113
    %s115 = sphi 0, %s113
    %s116 = sphi 0, %s115
    %s130 = sphi 0, %s116
    %s134 = sphi 0, %s134
    %s136 = sphi 0, %s134
    %s137 = sphi 0, %s136
    %s151 = sphi 0, %s137
    %s155 = sphi 0, %s155
    %s157 = sphi 0, %s155
    %s158 = sphi 0, %s157
    %s172 = sphi 0, %s158
    %s176 = sphi 0, %s176
    %s178 = sphi 0, %s176
    %s179 = sphi 0, %s178
    %s193 = sphi 0, %s179
    %s197 = sphi 0, %s197
    %s199 = sphi 0, %s197
    %s200 = sphi 0, %s199
    %s214 = sphi 0, %s200
    %s218 = sphi 0, %s218
    %s220 = sphi 0, %s218
    %s221 = sphi 0, %s220
    %s235 = sphi 0, %s221
    %s241 = sphi 0, %s243
    %s244 = sphi 0, %s241
    %s245 = sphi 0, %s244
    %s261 = sphi 0, %s245
  $region4: #{se_bottleneck_forward.1} parent=0 // loop_header_branch
    %19 = sbr.rel (%p17) target = $region8
  $region5: #{se_bottleneck_forward.1} parent=0 // loop_body
    %s21 = ssub.s32 %s16, 1
    %s22 = ssub.s32 %s16, 2
    %s23 = sadd.s32 %s16, 1
    %s24 = ssub.s32 %s16, %s23
    %p25 = scmp.eq.s32.totalorder %s24, 0
    %s27 = sadd.s32 %s26, 1
    %s28 = scalar_select %p25, %s26, %s27
    %p31 = pneg %p25
    %p32 = scmp.eq.s32.totalorder %s16, 1
    %p33 = por %p31, %p32
    %p34 = scmp.ne.s32.totalorder %s26, %s29
    %p35 = scmp.eq.s32.totalorder %s16, 0
    %p36 = por %p34, %p35
    %p37 = scmp.ne.s32.totalorder %s26, %s29
    %p38 = scmp.eq.s32.totalorder %s21, 1
    %p39 = por %p37, %p38
    %p40 = scmp.ne.s32.totalorder %s29, %s30
    %p41 = scmp.eq.s32.totalorder %s21, 0
    %p42 = por %p40, %p41
    %p43 = scmp.ne.s32.totalorder %s29, %s30
    %p44 = scmp.eq.s32.totalorder %s22, 1
    %p45 = por %p43, %p44
    %p47 = scmp.ne.s32.totalorder %s30, %s46
    %p48 = scmp.eq.s32.totalorder %s22, 0
    %p49 = por %p47, %p48
    %s51 = sadd.s32 %s50, 1
    %p54 = scmp.eq.s32.totalorder %s16, 1
    %p55 = scmp.ne.s32.totalorder %s50, %s52
    %p56 = scmp.eq.s32.totalorder %s16, 0
    %p57 = por %p55, %p56
    %p58 = scmp.ne.s32.totalorder %s50, %s52
    %p59 = scmp.eq.s32.totalorder %s21, 1
    %p60 = por %p58, %p59
    %p61 = scmp.ne.s32.totalorder %s52, %s53
    %p62 = scmp.eq.s32.totalorder %s21, 0
    %p63 = por %p61, %p62
    %p64 = scmp.ne.s32.totalorder %s52, %s53
    %p65 = scmp.eq.s32.totalorder %s22, 1
    %p66 = por %p64, %p65
    %p68 = scmp.ne.s32.totalorder %s53, %s67
    %p69 = scmp.eq.s32.totalorder %s22, 0
    %p70 = por %p68, %p69
    %s72 = sadd.s32 %s71, 1
    %p75 = scmp.eq.s32.totalorder %s16, 1
    %p76 = scmp.ne.s32.totalorder %s71, %s73
    %p77 = scmp.eq.s32.totalorder %s16, 0
    %p78 = por %p76, %p77
    %p79 = scmp.ne.s32.totalorder %s71, %s73
    %p80 = scmp.eq.s32.totalorder %s21, 1
    %p81 = por %p79, %p80
    %p82 = scmp.ne.s32.totalorder %s73, %s74
    %p83 = scmp.eq.s32.totalorder %s21, 0
    %p84 = por %p82, %p83
    %p85 = scmp.ne.s32.totalorder %s73, %s74
    %p86 = scmp.eq.s32.totalorder %s22, 1
    %p87 = por %p85, %p86
    %p89 = scmp.ne.s32.totalorder %s74, %s88
    %p90 = scmp.eq.s32.totalorder %s22, 0
    %p91 = por %p89, %p90
    %s93 = sadd.s32 %s92, 1
    %p96 = scmp.eq.s32.totalorder %s16, 1
    %p97 = scmp.ne.s32.totalorder %s92, %s94
    %p98 = scmp.eq.s32.totalorder %s16, 0
    %p99 = por %p97, %p98
    %p100 = scmp.ne.s32.totalorder %s92, %s94
    %p101 = scmp.eq.s32.totalorder %s21, 1
    %p102 = por %p100, %p101
    %p103 = scmp.ne.s32.totalorder %s94, %s95
    %p104 = scmp.eq.s32.totalorder %s21, 0
    %p105 = por %p103, %p104
    %p106 = scmp.ne.s32.totalorder %s94, %s95
    %p107 = scmp.eq.s32.totalorder %s22, 1
    %p108 = por %p106, %p107
    %p110 = scmp.ne.s32.totalorder %s95, %s109
    %p111 = scmp.eq.s32.totalorder %s22, 0
    %p112 = por %p110, %p111
    %s114 = sadd.s32 %s113, 1
    %p117 = scmp.eq.s32.totalorder %s16, 1
    %p118 = scmp.ne.s32.totalorder %s113, %s115
    %p119 = scmp.eq.s32.totalorder %s16, 0
    %p120 = por %p118, %p119
    %p121 = scmp.ne.s32.totalorder %s113, %s115
    %p122 = scmp.eq.s32.totalorder %s21, 1
    %p123 = por %p121, %p122
    %p124 = scmp.ne.s32.totalorder %s115, %s116
    %p125 = scmp.eq.s32.totalorder %s21, 0
    %p126 = por %p124, %p125
    %p127 = scmp.ne.s32.totalorder %s115, %s116
    %p128 = scmp.eq.s32.totalorder %s22, 1
    %p129 = por %p127, %p128
    %p131 = scmp.ne.s32.totalorder %s116, %s130
    %p132 = scmp.eq.s32.totalorder %s22, 0
    %p133 = por %p131, %p132
    %s135 = sadd.s32 %s134, 1
    %p138 = scmp.eq.s32.totalorder %s16, 1
    %p139 = scmp.ne.s32.totalorder %s134, %s136
    %p140 = scmp.eq.s32.totalorder %s16, 0
    %p141 = por %p139, %p140
    %p142 = scmp.ne.s32.totalorder %s134, %s136
    %p143 = scmp.eq.s32.totalorder %s21, 1
    %p144 = por %p142, %p143
    %p145 = scmp.ne.s32.totalorder %s136, %s137
    %p146 = scmp.eq.s32.totalorder %s21, 0
    %p147 = por %p145, %p146
    %p148 = scmp.ne.s32.totalorder %s136, %s137
    %p149 = scmp.eq.s32.totalorder %s22, 1
    %p150 = por %p148, %p149
    %p152 = scmp.ne.s32.totalorder %s137, %s151
    %p153 = scmp.eq.s32.totalorder %s22, 0
    %p154 = por %p152, %p153
    %s156 = sadd.s32 %s155, 1
    %p159 = scmp.eq.s32.totalorder %s16, 1
    %p160 = scmp.ne.s32.totalorder %s155, %s157
    %p161 = scmp.eq.s32.totalorder %s16, 0
    %p162 = por %p160, %p161
    %p163 = scmp.ne.s32.totalorder %s155, %s157
    %p164 = scmp.eq.s32.totalorder %s21, 1
    %p165 = por %p163, %p164
    %p166 = scmp.ne.s32.totalorder %s157, %s158
    %p167 = scmp.eq.s32.totalorder %s21, 0
    %p168 = por %p166, %p167
    %p169 = scmp.ne.s32.totalorder %s157, %s158
    %p170 = scmp.eq.s32.totalorder %s22, 1
    %p171 = por %p169, %p170
    %p173 = scmp.ne.s32.totalorder %s158, %s172
    %p174 = scmp.eq.s32.totalorder %s22, 0
    %p175 = por %p173, %p174
    %s177 = sadd.s32 %s176, 1
    %p180 = scmp.eq.s32.totalorder %s16, 1
    %p181 = scmp.ne.s32.totalorder %s176, %s178
    %p182 = scmp.eq.s32.totalorder %s16, 0
    %p183 = por %p181, %p182
    %p184 = scmp.ne.s32.totalorder %s176, %s178
    %p185 = scmp.eq.s32.totalorder %s21, 1
    %p186 = por %p184, %p185
    %p187 = scmp.ne.s32.totalorder %s178, %s179
    %p188 = scmp.eq.s32.totalorder %s21, 0
    %p189 = por %p187, %p188
    %p190 = scmp.ne.s32.totalorder %s178, %s179
    %p191 = scmp.eq.s32.totalorder %s22, 1
    %p192 = por %p190, %p191
    %p194 = scmp.ne.s32.totalorder %s179, %s193
    %p195 = scmp.eq.s32.totalorder %s22, 0
    %p196 = por %p194, %p195
    %s198 = sadd.s32 %s197, 1
    %p201 = scmp.eq.s32.totalorder %s16, 1
    %p202 = scmp.ne.s32.totalorder %s197, %s199
    %p203 = scmp.eq.s32.totalorder %s16, 0
    %p204 = por %p202, %p203
    %p205 = scmp.ne.s32.totalorder %s197, %s199
    %p206 = scmp.eq.s32.totalorder %s21, 1
    %p207 = por %p205, %p206
    %p208 = scmp.ne.s32.totalorder %s199, %s200
    %p209 = scmp.eq.s32.totalorder %s21, 0
    %p210 = por %p208, %p209
    %p211 = scmp.ne.s32.totalorder %s199, %s200
    %p212 = scmp.eq.s32.totalorder %s22, 1
    %p213 = por %p211, %p212
    %p215 = scmp.ne.s32.totalorder %s200, %s214
    %p216 = scmp.eq.s32.totalorder %s22, 0
    %p217 = por %p215, %p216
    %s219 = sadd.s32 %s218, 1
    %p222 = scmp.eq.s32.totalorder %s16, 1
    %p223 = scmp.ne.s32.totalorder %s218, %s220
    %p224 = scmp.eq.s32.totalorder %s16, 0
    %p225 = por %p223, %p224
    %p226 = scmp.ne.s32.totalorder %s218, %s220
    %p227 = scmp.eq.s32.totalorder %s21, 1
    %p228 = por %p226, %p227
    %p229 = scmp.ne.s32.totalorder %s220, %s221
    %p230 = scmp.eq.s32.totalorder %s21, 0
    %p231 = por %p229, %p230
    %p232 = scmp.ne.s32.totalorder %s220, %s221
    %p233 = scmp.eq.s32.totalorder %s22, 1
    %p234 = por %p232, %p233
    %p236 = scmp.ne.s32.totalorder %s221, %s235
    %p237 = scmp.eq.s32.totalorder %s22, 0
    %p238 = por %p236, %p237
    %s239 = ssub.s32 %s16, %s23
    %p240 = scmp.eq.s32.totalorder %s239, 0
    %s242 = sadd.s32 %s241, 1
    %s243 = scalar_select %p240, %s241, %s242
    %p246 = pneg %p240
    %p247 = scmp.eq.s32.totalorder %s16, 1
    %p248 = por %p246, %p247
    %p249 = scmp.ne.s32.totalorder %s241, %s244
    %p250 = scmp.eq.s32.totalorder %s16, 0
    %p251 = por %p249, %p250
    %p252 = scmp.ne.s32.totalorder %s241, %s244
    %p253 = scmp.eq.s32.totalorder %s21, 1
    %p254 = por %p252, %p253
    %p255 = scmp.ne.s32.totalorder %s244, %s245
    %p256 = scmp.eq.s32.totalorder %s21, 0
    %p257 = por %p255, %p256
    %p258 = scmp.ne.s32.totalorder %s244, %s245
    %p259 = scmp.eq.s32.totalorder %s22, 1
    %p260 = por %p258, %p259
    %p262 = scmp.ne.s32.totalorder %s245, %s261
    %p263 = scmp.eq.s32.totalorder %s22, 0
    %p264 = por %p262, %p263
    %p265 = scmp.le.s32.totalorder 1, %s16
    %p266 = scmp.lt.s32.totalorder %s16, 3
    %p267 = pnand %p265, %p266
    %p268 = pneg %p267
    // Predicated region
    $region9: #{se_bottleneck_forward.1} parent=5 // pred_check
      _
    $region10: #{se_bottleneck_forward.1} parent=5 // pred_check_branch
      %270 = sbr.rel (%p267) target = $region12
    $region11: #{se_bottleneck_forward.1} parent=5 // pred_region
      %s271 = ssub.s32 %s16, 1
      // Predicated region
      $region13: #{se_bottleneck_forward.1} parent=11 // pred_check
        %p272 = pneg %p63
      $region14: #{se_bottleneck_forward.1} parent=11 // pred_check_branch
        %274 = sbr.rel (%p272) target = $region16
      $region15: #{se_bottleneck_forward.1} parent=11 // pred_region
        _
      $region16: #{se_bottleneck_forward.1} parent=11 // pred_fallthru
        _
      // Predicated region
      $region17: #{se_bottleneck_forward.1} parent=11 // pred_check
        %p275 = pneg %p84
      $region18: #{se_bottleneck_forward.1} parent=11 // pred_check_branch
        %277 = sbr.rel (%p275) target = $region20
      $region19: #{se_bottleneck_forward.1} parent=11 // pred_region
        _
      $region20: #{se_bottleneck_forward.1} parent=11 // pred_fallthru
        _
      // Predicated region
      $region21: #{se_bottleneck_forward.1} parent=11 // pred_check
        %p278 = pneg %p105
      $region22: #{se_bottleneck_forward.1} parent=11 // pred_check_branch
        %280 = sbr.rel (%p278) target = $region24
      $region23: #{se_bottleneck_forward.1} parent=11 // pred_region
        _
      $region24: #{se_bottleneck_forward.1} parent=11 // pred_fallthru
        _
      // Predicated region
      $region25: #{se_bottleneck_forward.1} parent=11 // pred_check
        %p281 = pneg %p126
      $region26: #{se_bottleneck_forward.1} parent=11 // pred_check_branch
        %283 = sbr.rel (%p281) target = $region28
      $region27: #{se_bottleneck_forward.1} parent=11 // pred_region
        _
      $region28: #{se_bottleneck_forward.1} parent=11 // pred_fallthru
        _
      // Predicated region
      $region29: #{se_bottleneck_forward.1} parent=11 // pred_check
        %p284 = pneg %p147
      $region30: #{se_bottleneck_forward.1} parent=11 // pred_check_branch
        %286 = sbr.rel (%p284) target = $region32
      $region31: #{se_bottleneck_forward.1} parent=11 // pred_region
        _
      $region32: #{se_bottleneck_forward.1} parent=11 // pred_fallthru
        _
      // Predicated region
      $region33: #{se_bottleneck_forward.1} parent=11 // pred_check
        %p287 = pneg %p168
      $region34: #{se_bottleneck_forward.1} parent=11 // pred_check_branch
        %289 = sbr.rel (%p287) target = $region36
      $region35: #{se_bottleneck_forward.1} parent=11 // pred_region
        _
      $region36: #{se_bottleneck_forward.1} parent=11 // pred_fallthru
        _
      // Predicated region
      $region37: #{se_bottleneck_forward.1} parent=11 // pred_check
        %p290 = pneg %p189
      $region38: #{se_bottleneck_forward.1} parent=11 // pred_check_branch
        %292 = sbr.rel (%p290) target = $region40
      $region39: #{se_bottleneck_forward.1} parent=11 // pred_region
        _
      $region40: #{se_bottleneck_forward.1} parent=11 // pred_fallthru
        _
      // Predicated region
      $region41: #{se_bottleneck_forward.1} parent=11 // pred_check
        %p293 = pneg %p210
      $region42: #{se_bottleneck_forward.1} parent=11 // pred_check_branch
        %295 = sbr.rel (%p293) target = $region44
      $region43: #{se_bottleneck_forward.1} parent=11 // pred_region
        _
      $region44: #{se_bottleneck_forward.1} parent=11 // pred_fallthru
        _
      // Predicated region
      $region45: #{se_bottleneck_forward.1} parent=11 // pred_check
        %p296 = pneg %p231
      $region46: #{se_bottleneck_forward.1} parent=11 // pred_check_branch
        %298 = sbr.rel (%p296) target = $region48
      $region47: #{se_bottleneck_forward.1} parent=11 // pred_region
        _
      $region48: #{se_bottleneck_forward.1} parent=11 // pred_fallthru
        _
    $region12: #{se_bottleneck_forward.1} parent=5 // pred_fallthru
      _
    %p299 = scmp.lt.s32.totalorder %s16, 2
    // Predicated region
    $region49: #{se_bottleneck_forward.1} parent=5 // pred_check
      %p300 = pneg %p299
    $region50: #{se_bottleneck_forward.1} parent=5 // pred_check_branch
      %302 = sbr.rel (%p300) target = $region52
    $region51: #{se_bottleneck_forward.1} parent=5 // pred_region
      // Predicated region
      $region53: #{se_bottleneck_forward.1} parent=51 // pred_check
        %p303 = pneg %p36
      $region54: #{se_bottleneck_forward.1} parent=51 // pred_check_branch
        %305 = sbr.rel (%p303) target = $region56
      $region55: #{se_bottleneck_forward.1} parent=51 // pred_region
        %p306 = scmp.lt.s32.totalorder %s16, 1
        %s307 = scalar_select %p306, %s16, 1
        %s308 = smul.addr %s307, 8
        %s309 = smul.addr %s308, 8
        %s310 = scalar_lea.vmem %s0, %s309
      $region56: #{se_bottleneck_forward.1} parent=51 // pred_fallthru
        _
    $region52: #{se_bottleneck_forward.1} parent=5 // pred_fallthru
      _
    %p311 = scmp.le.s32.totalorder 1, %s16
    %p312 = scmp.lt.s32.totalorder %s16, 3
    %p313 = pnand %p311, %p312
    %p314 = pneg %p313
    // Predicated region
    $region57: #{se_bottleneck_forward.1} parent=5 // pred_check
      _
    $region58: #{se_bottleneck_forward.1} parent=5 // pred_check_branch
      %316 = sbr.rel (%p313) target = $region60
    $region59: #{se_bottleneck_forward.1} parent=5 // pred_region
      %s317 = ssub.s32 %s16, 1
      %p318 = scmp.lt.s32.totalorder %s21, 1
      %s319 = scalar_select %p318, %s21, 1
      %s320 = smul.addr %s319, 8
      %s321 = smul.addr %s320, 8
      %s322 = scalar_lea.vmem %s0, %s321
      %p323 = pneg %p42
      %p324 = pneg %p39
      %p325 = pneg %p63
      %p326 = pneg %p60
      %p327 = pneg %p84
      %p328 = pneg %p81
      %p329 = pneg %p105
      %p330 = pneg %p102
      %p331 = pneg %p126
      %p332 = pneg %p123
      %p333 = pneg %p147
      %p334 = pneg %p144
      %p335 = pneg %p168
      %p336 = pneg %p165
      %p337 = pneg %p189
      %p338 = pneg %p186
      %p339 = pneg %p210
      %p340 = pneg %p207
      %p341 = pneg %p231
      %p342 = pneg %p228
      %p343 = pneg %p257
      %p344 = pneg %p254
      %p345 = scmp.lt.s32.totalorder %s21, 1
      %s346 = scalar_select %p345, %s21, 1
      %s347 = smul.addr %s346, 8
      %s348 = smul.addr %s347, 8
      %s349 = scalar_lea.vmem %s10, %s348
      %p350 = scmp.lt.s32.totalorder %s21, 1
      %s351 = scalar_select %p350, %s21, 1
      %s352 = smul.addr %s351, 8
      %s353 = smul.addr %s352, 8
      %s354 = scalar_lea.vmem %s0, %s353
      %p355 = scmp.lt.s32.totalorder %s21, 1
      %s356 = scalar_select %p355, %s21, 1
      %s357 = smul.addr %s356, 8
      %s358 = smul.addr %s357, 8
      %s359 = scalar_lea.vmem %s10, %s358
      %v361 = vld [vmem:[%s354] sm:$0xff]
      %v362 = vld [vmem:[%s354 + $0x8] sm:$0xff]
      %v363 = vld [vmem:[%s354 + $0x10] sm:$0xff]
      %v364 = vld [vmem:[%s354 + $0x18] sm:$0xff]
      %v365 = vld [vmem:[%s354 + $0x20] sm:$0xff]
      %v366 = vld [vmem:[%s354 + $0x28] sm:$0xff]
      %v367 = vld [vmem:[%s354 + $0x30] sm:$0xff]
      %v368 = vld [vmem:[%s354 + $0x38] sm:$0xff]
      %v369 = vld [vmem:[%s2] sm:$0x3]
      %v370 = vpack.c.bf16 %v365, %v361
      %v371 = vpack.c.bf16 %v366, %v362
      %v372 = vpack.c.bf16 %v367, %v363
      %v373 = vpack.c.bf16 %v368, %v364
      %v374 = vld [vmem:[%s3] sm:$0xf]
      %376 = vset.pattern.permute.xlu0 0
      %377 = vperm.xlu0 %376, %v374
      %v378 = vpop.permute.xlu0 %377
      %vm380 = vcmask 130048
      %v382 = vsel %vm380, %v369, 0
      %384 = vmatprep.subr.bf16.mxu0 0
      %385 = vmatpush1.bf16.msra.mxu0 0
      %386 = vmatprep.subr.bf16.mxu0 0
      %387 = vmatpush1.bf16.msra.mxu0 0
      %388 = vmatprep.subr.bf16.mxu0 0
      %389 = vmatpush1.bf16.msra.mxu0 0
      %390 = vmatprep.subr.bf16.mxu0 0
      %391 = vmatpush1.bf16.msra.mxu0 0
      %392 = vmatprep.subr.bf16.mxu0 0
      %393 = vmatpush1.bf16.msra.mxu0 0
      %394 = vmatprep.subr.bf16.mxu0 0
      %395 = vmatpush1.bf16.msra.mxu0 0
      %396 = vmatprep.subr.bf16.mxu0 0
      %397 = vmatpush1.bf16.msra.mxu0 0
      %398 = vmatprep.subr.bf16.mxu0 %v371
      %399 = vmatpush1.bf16.msra.mxu0 %v370
      %400 = vmatprep.subr.bf16.mxu0 0
      %401 = vmatpush2.bf16.msra.mxu0 0
      %402 = vmatprep.subr.bf16.mxu0 0
      %403 = vmatpush2.bf16.msra.mxu0 0
      %404 = vmatprep.subr.bf16.mxu0 0
      %405 = vmatpush2.bf16.msra.mxu0 0
      %406 = vmatprep.subr.bf16.mxu0 0
      %407 = vmatpush2.bf16.msra.mxu0 0
      %408 = vmatprep.subr.bf16.mxu0 0
      %409 = vmatpush2.bf16.msra.mxu0 0
      %410 = vmatprep.subr.bf16.mxu0 0
      %411 = vmatpush2.bf16.msra.mxu0 0
      %412 = vmatprep.subr.bf16.mxu0 0
      %413 = vmatpush2.bf16.msra.mxu0 0
      %414 = vmatprep.subr.bf16.mxu0 0
      %415 = vmatpush2.bf16.msra.mxu0 0
      %416 = vmatprep.mubr.bf16.mxu0 0
      %417 = vmatmul.mubr.bf16.gmra.mxu0 %v382
      %v418 = vpop.f32.mrf.mxu0
      %v419 = vadd.f32 %v378, %v418
      %v420 = vpop.f32.mrf.mxu0
      %v421 = vadd.f32 %v378, %v420
      %v422 = vpop.f32.mrf.mxu0
      %v423 = vpop.f32.mrf.mxu0
      %424 = vdwg.mxu0
      %425 = vmatprep.subr.bf16.mxu0 0
      %426 = vmatpush1.bf16.msra.mxu0 0
      %427 = vmatprep.subr.bf16.mxu0 0
      %428 = vmatpush1.bf16.msra.mxu0 0
      %429 = vmatprep.subr.bf16.mxu0 0
      %430 = vmatpush1.bf16.msra.mxu0 0
      %431 = vmatprep.subr.bf16.mxu0 0
      %432 = vmatpush1.bf16.msra.mxu0 0
      %433 = vmatprep.subr.bf16.mxu0 0
      %434 = vmatpush1.bf16.msra.mxu0 0
      %435 = vmatprep.subr.bf16.mxu0 0
      %436 = vmatpush1.bf16.msra.mxu0 0
      %437 = vmatprep.subr.bf16.mxu0 0
      %438 = vmatpush1.bf16.msra.mxu0 0
      %439 = vmatprep.subr.bf16.mxu0 %v373
      %440 = vmatpush1.bf16.msra.mxu0 %v372
      %441 = vmatprep.subr.bf16.mxu0 0
      %442 = vmatpush2.bf16.msra.mxu0 0
      %443 = vmatprep.subr.bf16.mxu0 0
      %444 = vmatpush2.bf16.msra.mxu0 0
      %445 = vmatprep.subr.bf16.mxu0 0
      %446 = vmatpush2.bf16.msra.mxu0 0
      %447 = vmatprep.subr.bf16.mxu0 0
      %448 = vmatpush2.bf16.msra.mxu0 0
      %449 = vmatprep.subr.bf16.mxu0 0
      %450 = vmatpush2.bf16.msra.mxu0 0
      %451 = vmatprep.subr.bf16.mxu0 0
      %452 = vmatpush2.bf16.msra.mxu0 0
      %453 = vmatprep.subr.bf16.mxu0 0
      %454 = vmatpush2.bf16.msra.mxu0 0
      %455 = vmatprep.subr.bf16.mxu0 0
      %456 = vmatpush2.bf16.msra.mxu0 0
      %457 = vmatprep.mubr.bf16.mxu0 0
      %458 = vmatmul.mubr.bf16.gmra.mxu0 %v382
      %v459 = vpop.f32.mrf.mxu0
      %v460 = vadd.f32 %v378, %v459
      %v461 = vpop.f32.mrf.mxu0
      %v462 = vadd.f32 %v378, %v461
      %v463 = vpop.f32.mrf.mxu0
      %v464 = vpop.f32.mrf.mxu0
      %465 = vdwg.mxu0
      %v466 = vmax.f32 %v419, 0.0
      %v467 = vmax.f32 %v421, 0.0
      %v468 = vmax.f32 %v460, 0.0
      %v469 = vmax.f32 %v462, 0.0
      %470 = vrot.lane.b32.xlu0 %v466, 73
      %v471 = vpop.permute.xlu0 %470
      %472 = vrot.lane.b32.xlu0 %v467, 73
      %v473 = vpop.permute.xlu0 %472
      %474 = vrot.lane.b32.xlu0 %v468, 73
      %v475 = vpop.permute.xlu0 %474
      %476 = vrot.lane.b32.xlu0 %v469, 73
      %v477 = vpop.permute.xlu0 %476
      %v478 = vlaneseq
      %v479 = vand.u32 %v478, 127
      %vm480 = vcmp.lt.s32.totalorder %v479, 73
      %v481 = vsel %vm480, %v475, %v477
      %v482 = vsel %vm480, %v473, %v475
      %v483 = vsel %vm480, %v471, %v473
      %v484 = vsel %vm480, %v477, %v471
      %485 = vst [vmem:[#allocation2] sm:$0xf] %v484
      %486 = vst [vmem:[#allocation2 + $0x8] sm:$0xf] %v483
      %487 = vst [vmem:[#allocation2 + $0x10] sm:$0xf] %v482
      %488 = vst [vmem:[#allocation2 + $0x18] sm:$0xf] %v481
      %489 = vrot.lane.b32.xlu0 %v466, 72
      %v490 = vpop.permute.xlu0 %489
      %491 = vrot.lane.b32.xlu0 %v467, 72
      %v492 = vpop.permute.xlu0 %491
      %493 = vrot.lane.b32.xlu0 %v468, 72
      %v494 = vpop.permute.xlu0 %493
      %495 = vrot.lane.b32.xlu0 %v469, 72
      %v496 = vpop.permute.xlu0 %495
      %vm497 = vcmp.lt.s32.totalorder %v479, 72
      %v498 = vsel %vm497, %v494, %v496
      %v499 = vsel %vm497, %v492, %v494
      %v500 = vsel %vm497, %v490, %v492
      %v501 = vsel %vm497, %v496, %v490
      %v506 = vrot.slane %v501, 4
      %v507 = vrot.slane %v500, 4
      %v508 = vrot.slane %v499, 4
      %v509 = vrot.slane %v498, 4
      %514 = vst [vmem:[#allocation2] sm:$0xf0] %v506
      %515 = vst [vmem:[#allocation2 + $0x8] sm:$0xf0] %v507
      %516 = vst [vmem:[#allocation2 + $0x10] sm:$0xf0] %v508
      %517 = vst [vmem:[#allocation2 + $0x18] sm:$0xf0] %v509
      %518 = vrot.lane.b32.xlu0 %v466, 71
      %v519 = vpop.permute.xlu0 %518
      %520 = vrot.lane.b32.xlu0 %v467, 71
      %v521 = vpop.permute.xlu0 %520
      %522 = vrot.lane.b32.xlu0 %v468, 71
      %v523 = vpop.permute.xlu0 %522
      %524 = vrot.lane.b32.xlu0 %v469, 71
      %v525 = vpop.permute.xlu0 %524
      %vm526 = vcmp.lt.s32.totalorder %v479, 71
      %v527 = vsel %vm526, %v523, %v525
      %v528 = vsel %vm526, %v521, %v523
      %v529 = vsel %vm526, %v519, %v521
      %v530 = vsel %vm526, %v525, %v519
      %531 = vst [vmem:[#allocation2 + $0x20] sm:$0xf] %v530
      %532 = vst [vmem:[#allocation2 + $0x28] sm:$0xf] %v529
      %533 = vst [vmem:[#allocation2 + $0x30] sm:$0xf] %v528
      %534 = vst [vmem:[#allocation2 + $0x38] sm:$0xf] %v527
      %535 = vrot.lane.b32.xlu0 %v466, 65
      %v536 = vpop.permute.xlu0 %535
      %537 = vrot.lane.b32.xlu0 %v467, 65
      %v538 = vpop.permute.xlu0 %537
      %539 = vrot.lane.b32.xlu0 %v468, 65
      %v540 = vpop.permute.xlu0 %539
      %541 = vrot.lane.b32.xlu0 %v469, 65
      %v542 = vpop.permute.xlu0 %541
      %vm543 = vcmp.lt.s32.totalorder %v479, 65
      %v544 = vsel %vm543, %v540, %v542
      %v545 = vsel %vm543, %v538, %v540
      %v546 = vsel %vm543, %v536, %v538
      %v547 = vsel %vm543, %v542, %v536
      %v552 = vrot.slane %v547, 4
      %v553 = vrot.slane %v546, 4
      %v554 = vrot.slane %v545, 4
      %v555 = vrot.slane %v544, 4
      %560 = vst [vmem:[#allocation2 + $0x20] sm:$0xf0] %v552
      %561 = vst [vmem:[#allocation2 + $0x28] sm:$0xf0] %v553
      %562 = vst [vmem:[#allocation2 + $0x30] sm:$0xf0] %v554
      %563 = vst [vmem:[#allocation2 + $0x38] sm:$0xf0] %v555
      %564 = vrot.lane.b32.xlu0 %v466, 64
      %v565 = vpop.permute.xlu0 %564
      %566 = vrot.lane.b32.xlu0 %v467, 64
      %v567 = vpop.permute.xlu0 %566
      %568 = vrot.lane.b32.xlu0 %v468, 64
      %v569 = vpop.permute.xlu0 %568
      %570 = vrot.lane.b32.xlu0 %v469, 64
      %v571 = vpop.permute.xlu0 %570
      %vm572 = vcmp.lt.s32.totalorder %v479, 64
      %v573 = vsel %vm572, %v569, %v571
      %v574 = vsel %vm572, %v567, %v569
      %v575 = vsel %vm572, %v565, %v567
      %v576 = vsel %vm572, %v571, %v565
      %577 = vst [vmem:[#allocation2 + $0x40] sm:$0xf] %v576
      %578 = vst [vmem:[#allocation2 + $0x48] sm:$0xf] %v575
      %579 = vst [vmem:[#allocation2 + $0x50] sm:$0xf] %v574
      %580 = vst [vmem:[#allocation2 + $0x58] sm:$0xf] %v573
      %581 = vrot.lane.b32.xlu0 %v466, 63
      %v582 = vpop.permute.xlu0 %581
      %583 = vrot.lane.b32.xlu0 %v467, 63
      %v584 = vpop.permute.xlu0 %583
      %585 = vrot.lane.b32.xlu0 %v468, 63
      %v586 = vpop.permute.xlu0 %585
      %587 = vrot.lane.b32.xlu0 %v469, 63
      %v588 = vpop.permute.xlu0 %587
      %vm589 = vcmp.lt.s32.totalorder %v479, 63
      %v590 = vsel %vm589, %v586, %v588
      %v591 = vsel %vm589, %v584, %v586
      %v592 = vsel %vm589, %v582, %v584
      %v593 = vsel %vm589, %v588, %v582
      %v598 = vrot.slane %v593, 4
      %v599 = vrot.slane %v592, 4
      %v600 = vrot.slane %v591, 4
      %v601 = vrot.slane %v590, 4
      %606 = vst [vmem:[#allocation2 + $0x40] sm:$0xf0] %v598
      %607 = vst [vmem:[#allocation2 + $0x48] sm:$0xf0] %v599
      %608 = vst [vmem:[#allocation2 + $0x50] sm:$0xf0] %v600
      %609 = vst [vmem:[#allocation2 + $0x58] sm:$0xf0] %v601
      %610 = vrot.lane.b32.xlu0 %v466, 57
      %v611 = vpop.permute.xlu0 %610
      %612 = vrot.lane.b32.xlu0 %v467, 57
      %v613 = vpop.permute.xlu0 %612
      %614 = vrot.lane.b32.xlu0 %v468, 57
      %v615 = vpop.permute.xlu0 %614
      %616 = vrot.lane.b32.xlu0 %v469, 57
      %v617 = vpop.permute.xlu0 %616
      %vm618 = vcmp.lt.s32.totalorder %v479, 57
      %v619 = vsel %vm618, %v615, %v617
      %v620 = vsel %vm618, %v613, %v615
      %v621 = vsel %vm618, %v611, %v613
      %v622 = vsel %vm618, %v617, %v611
      %623 = vst [vmem:[#allocation2 + $0x60] sm:$0xf] %v622
      %624 = vst [vmem:[#allocation2 + $0x68] sm:$0xf] %v621
      %625 = vst [vmem:[#allocation2 + $0x70] sm:$0xf] %v620
      %626 = vst [vmem:[#allocation2 + $0x78] sm:$0xf] %v619
      %627 = vrot.lane.b32.xlu0 %v466, 56
      %v628 = vpop.permute.xlu0 %627
      %629 = vrot.lane.b32.xlu0 %v467, 56
      %v630 = vpop.permute.xlu0 %629
      %631 = vrot.lane.b32.xlu0 %v468, 56
      %v632 = vpop.permute.xlu0 %631
      %633 = vrot.lane.b32.xlu0 %v469, 56
      %v634 = vpop.permute.xlu0 %633
      %vm635 = vcmp.lt.s32.totalorder %v479, 56
      %v636 = vsel %vm635, %v632, %v634
      %v637 = vsel %vm635, %v630, %v632
      %v638 = vsel %vm635, %v628, %v630
      %v639 = vsel %vm635, %v634, %v628
      %v644 = vrot.slane %v639, 4
      %v645 = vrot.slane %v638, 4
      %v646 = vrot.slane %v637, 4
      %v647 = vrot.slane %v636, 4
      %652 = vst [vmem:[#allocation2 + $0x60] sm:$0xf0] %v644
      %653 = vst [vmem:[#allocation2 + $0x68] sm:$0xf0] %v645
      %654 = vst [vmem:[#allocation2 + $0x70] sm:$0xf0] %v646
      %655 = vst [vmem:[#allocation2 + $0x78] sm:$0xf0] %v647
      %656 = vrot.lane.b32.xlu0 %v466, 55
      %v657 = vpop.permute.xlu0 %656
      %658 = vrot.lane.b32.xlu0 %v467, 55
      %v659 = vpop.permute.xlu0 %658
      %660 = vrot.lane.b32.xlu0 %v468, 55
      %v661 = vpop.permute.xlu0 %660
      %662 = vrot.lane.b32.xlu0 %v469, 55
      %v663 = vpop.permute.xlu0 %662
      %vm664 = vcmp.lt.s32.totalorder %v479, 55
      %v665 = vsel %vm664, %v661, %v663
      %v666 = vsel %vm664, %v659, %v661
      %v667 = vsel %vm664, %v657, %v659
      %v668 = vsel %vm664, %v663, %v657
      %669 = vst [vmem:[#allocation2 + $0x80] sm:$0xf] %v668
      %670 = vst [vmem:[#allocation2 + $0x88] sm:$0xf] %v667
      %671 = vst [vmem:[#allocation2 + $0x90] sm:$0xf] %v666
      %672 = vst [vmem:[#allocation2 + $0x98] sm:$0xf] %v665
      %673 = vrot.lane.b32.xlu0 %v466, 9
      %v674 = vpop.permute.xlu0 %673
      %675 = vrot.lane.b32.xlu0 %v467, 9
      %v676 = vpop.permute.xlu0 %675
      %677 = vrot.lane.b32.xlu0 %v468, 9
      %v678 = vpop.permute.xlu0 %677
      %679 = vrot.lane.b32.xlu0 %v469, 9
      %v680 = vpop.permute.xlu0 %679
      %vm681 = vcmp.lt.s32.totalorder %v479, 9
      %v682 = vsel %vm681, %v678, %v680
      %v683 = vsel %vm681, %v676, %v678
      %v684 = vsel %vm681, %v674, %v676
      %v685 = vsel %vm681, %v680, %v674
      %v690 = vrot.slane %v685, 4
      %v691 = vrot.slane %v684, 4
      %v692 = vrot.slane %v683, 4
      %v693 = vrot.slane %v682, 4
      %698 = vst [vmem:[#allocation2 + $0x80] sm:$0xf0] %v690
      %699 = vst [vmem:[#allocation2 + $0x88] sm:$0xf0] %v691
      %700 = vst [vmem:[#allocation2 + $0x90] sm:$0xf0] %v692
      %701 = vst [vmem:[#allocation2 + $0x98] sm:$0xf0] %v693
      %702 = vrot.lane.b32.xlu0 %v466, 8
      %v703 = vpop.permute.xlu0 %702
      %704 = vrot.lane.b32.xlu0 %v467, 8
      %v705 = vpop.permute.xlu0 %704
      %706 = vrot.lane.b32.xlu0 %v468, 8
      %v707 = vpop.permute.xlu0 %706
      %708 = vrot.lane.b32.xlu0 %v469, 8
      %v709 = vpop.permute.xlu0 %708
      %vm710 = vcmp.lt.s32.totalorder %v479, 8
      %v711 = vsel %vm710, %v707, %v709
      %v712 = vsel %vm710, %v705, %v707
      %v713 = vsel %vm710, %v703, %v705
      %v714 = vsel %vm710, %v709, %v703
      %715 = vst [vmem:[#allocation2 + $0xa0] sm:$0xf] %v714
      %716 = vst [vmem:[#allocation2 + $0xa8] sm:$0xf] %v713
      %717 = vst [vmem:[#allocation2 + $0xb0] sm:$0xf] %v712
      %718 = vst [vmem:[#allocation2 + $0xb8] sm:$0xf] %v711
      %719 = vrot.lane.b32.xlu0 %v466, 7
      %v720 = vpop.permute.xlu0 %719
      %721 = vrot.lane.b32.xlu0 %v467, 7
      %v722 = vpop.permute.xlu0 %721
      %723 = vrot.lane.b32.xlu0 %v468, 7
      %v724 = vpop.permute.xlu0 %723
      %725 = vrot.lane.b32.xlu0 %v469, 7
      %v726 = vpop.permute.xlu0 %725
      %vm727 = vcmp.lt.s32.totalorder %v479, 7
      %v728 = vsel %vm727, %v724, %v726
      %v729 = vsel %vm727, %v722, %v724
      %v730 = vsel %vm727, %v720, %v722
      %v731 = vsel %vm727, %v726, %v720
      %v736 = vrot.slane %v731, 4
      %v737 = vrot.slane %v730, 4
      %v738 = vrot.slane %v729, 4
      %v739 = vrot.slane %v728, 4
      %744 = vst [vmem:[#allocation2 + $0xa0] sm:$0xf0] %v736
      %745 = vst [vmem:[#allocation2 + $0xa8] sm:$0xf0] %v737
      %746 = vst [vmem:[#allocation2 + $0xb0] sm:$0xf0] %v738
      %747 = vst [vmem:[#allocation2 + $0xb8] sm:$0xf0] %v739
      %748 = vrot.lane.b32.xlu0 %v466, 1
      %v749 = vpop.permute.xlu0 %748
      %750 = vrot.lane.b32.xlu0 %v467, 1
      %v751 = vpop.permute.xlu0 %750
      %752 = vrot.lane.b32.xlu0 %v468, 1
      %v753 = vpop.permute.xlu0 %752
      %754 = vrot.lane.b32.xlu0 %v469, 1
      %v755 = vpop.permute.xlu0 %754
      %vm756 = vcmp.lt.s32.totalorder %v479, 1
      %v757 = vsel %vm756, %v753, %v755
      %v758 = vsel %vm756, %v751, %v753
      %v759 = vsel %vm756, %v749, %v751
      %v760 = vsel %vm756, %v755, %v749
      %761 = vst [vmem:[#allocation2 + $0xc0] sm:$0xf] %v760
      %762 = vst [vmem:[#allocation2 + $0xc8] sm:$0xf] %v759
      %763 = vst [vmem:[#allocation2 + $0xd0] sm:$0xf] %v758
      %764 = vst [vmem:[#allocation2 + $0xd8] sm:$0xf] %v757
      %v769 = vrot.slane %v466, 4
      %v770 = vrot.slane %v467, 4
      %v771 = vrot.slane %v468, 4
      %v772 = vrot.slane %v469, 4
      %777 = vst [vmem:[#allocation2 + $0xc0] sm:$0xf0] %v769
      %778 = vst [vmem:[#allocation2 + $0xc8] sm:$0xf0] %v770
      %779 = vst [vmem:[#allocation2 + $0xd0] sm:$0xf0] %v771
      %780 = vst [vmem:[#allocation2 + $0xd8] sm:$0xf0] %v772
      %781 = vrot.lane.b32.xlu0 %v466, 127
      %v782 = vpop.permute.xlu0 %781
      %783 = vrot.lane.b32.xlu0 %v467, 127
      %v784 = vpop.permute.xlu0 %783
      %785 = vrot.lane.b32.xlu0 %v468, 127
      %v786 = vpop.permute.xlu0 %785
      %787 = vrot.lane.b32.xlu0 %v469, 127
      %v788 = vpop.permute.xlu0 %787
      %vm789 = vcmp.lt.s32.totalorder %v479, 127
      %v790 = vsel %vm789, %v786, %v788
      %v791 = vsel %vm789, %v784, %v786
      %v792 = vsel %vm789, %v782, %v784
      %v793 = vsel %vm789, %v788, %v782
      %794 = vst [vmem:[#allocation2 + $0xe0] sm:$0xf] %v792
      %795 = vst [vmem:[#allocation2 + $0xe8] sm:$0xf] %v791
      %796 = vst [vmem:[#allocation2 + $0xf0] sm:$0xf] %v790
      %797 = vst [vmem:[#allocation2 + $0xf8] sm:$0xf] %v793
      %798 = vrot.lane.b32.xlu0 %v466, 121
      %v799 = vpop.permute.xlu0 %798
      %800 = vrot.lane.b32.xlu0 %v467, 121
      %v801 = vpop.permute.xlu0 %800
      %802 = vrot.lane.b32.xlu0 %v468, 121
      %v803 = vpop.permute.xlu0 %802
      %804 = vrot.lane.b32.xlu0 %v469, 121
      %v805 = vpop.permute.xlu0 %804
      %vm806 = vcmp.lt.s32.totalorder %v479, 121
      %v807 = vsel %vm806, %v803, %v805
      %v808 = vsel %vm806, %v801, %v803
      %v809 = vsel %vm806, %v799, %v801
      %v810 = vsel %vm806, %v805, %v799
      %v815 = vrot.slane %v809, 4
      %v816 = vrot.slane %v808, 4
      %v817 = vrot.slane %v807, 4
      %v818 = vrot.slane %v810, 4
      %823 = vst [vmem:[#allocation2 + $0xe0] sm:$0xf0] %v815
      %824 = vst [vmem:[#allocation2 + $0xe8] sm:$0xf0] %v816
      %825 = vst [vmem:[#allocation2 + $0xf0] sm:$0xf0] %v817
      %826 = vst [vmem:[#allocation2 + $0xf8] sm:$0xf0] %v818
      %827 = vrot.lane.b32.xlu0 %v466, 120
      %v828 = vpop.permute.xlu0 %827
      %829 = vrot.lane.b32.xlu0 %v467, 120
      %v830 = vpop.permute.xlu0 %829
      %831 = vrot.lane.b32.xlu0 %v468, 120
      %v832 = vpop.permute.xlu0 %831
      %833 = vrot.lane.b32.xlu0 %v469, 120
      %v834 = vpop.permute.xlu0 %833
      %vm835 = vcmp.lt.s32.totalorder %v479, 120
      %v836 = vsel %vm835, %v832, %v834
      %v837 = vsel %vm835, %v830, %v832
      %v838 = vsel %vm835, %v828, %v830
      %v839 = vsel %vm835, %v834, %v828
      %840 = vst [vmem:[#allocation2 + $0x100] sm:$0xf] %v838
      %841 = vst [vmem:[#allocation2 + $0x108] sm:$0xf] %v837
      %842 = vst [vmem:[#allocation2 + $0x110] sm:$0xf] %v836
      %843 = vst [vmem:[#allocation2 + $0x118] sm:$0xf] %v839
      %844 = vrot.lane.b32.xlu0 %v466, 119
      %v845 = vpop.permute.xlu0 %844
      %846 = vrot.lane.b32.xlu0 %v467, 119
      %v847 = vpop.permute.xlu0 %846
      %848 = vrot.lane.b32.xlu0 %v468, 119
      %v849 = vpop.permute.xlu0 %848
      %850 = vrot.lane.b32.xlu0 %v469, 119
      %v851 = vpop.permute.xlu0 %850
      %vm852 = vcmp.lt.s32.totalorder %v479, 119
      %v853 = vsel %vm852, %v849, %v851
      %v854 = vsel %vm852, %v847, %v849
      %v855 = vsel %vm852, %v845, %v847
      %v856 = vsel %vm852, %v851, %v845
      %v861 = vrot.slane %v855, 4
      %v862 = vrot.slane %v854, 4
      %v863 = vrot.slane %v853, 4
      %v864 = vrot.slane %v856, 4
      %869 = vst [vmem:[#allocation2 + $0x100] sm:$0xf0] %v861
      %870 = vst [vmem:[#allocation2 + $0x108] sm:$0xf0] %v862
      %871 = vst [vmem:[#allocation2 + $0x110] sm:$0xf0] %v863
      %872 = vst [vmem:[#allocation2 + $0x118] sm:$0xf0] %v864
      %873 = vst [vmem:[#allocation2 + $0x120] sm:$0xf] %v483
      %874 = vst [vmem:[#allocation2 + $0x128] sm:$0xf] %v482
      %875 = vst [vmem:[#allocation2 + $0x130] sm:$0xf] %v481
      %876 = vst [vmem:[#allocation2 + $0x138] sm:$0xf] %v484
      %877 = vst [vmem:[#allocation2 + $0x120] sm:$0xf0] %v507
      %878 = vst [vmem:[#allocation2 + $0x128] sm:$0xf0] %v508
      %879 = vst [vmem:[#allocation2 + $0x130] sm:$0xf0] %v509
      %880 = vst [vmem:[#allocation2 + $0x138] sm:$0xf0] %v506
      %881 = vst [vmem:[#allocation2 + $0x140] sm:$0xf] %v529
      %882 = vst [vmem:[#allocation2 + $0x148] sm:$0xf] %v528
      %883 = vst [vmem:[#allocation2 + $0x150] sm:$0xf] %v527
      %884 = vst [vmem:[#allocation2 + $0x158] sm:$0xf] %v530
      %885 = vst [vmem:[#allocation2 + $0x140] sm:$0xf0] %v553
      %886 = vst [vmem:[#allocation2 + $0x148] sm:$0xf0] %v554
      %887 = vst [vmem:[#allocation2 + $0x150] sm:$0xf0] %v555
      %888 = vst [vmem:[#allocation2 + $0x158] sm:$0xf0] %v552
      %889 = vst [vmem:[#allocation2 + $0x160] sm:$0xf] %v575
      %890 = vst [vmem:[#allocation2 + $0x168] sm:$0xf] %v574
      %891 = vst [vmem:[#allocation2 + $0x170] sm:$0xf] %v573
      %892 = vst [vmem:[#allocation2 + $0x178] sm:$0xf] %v576
      %893 = vst [vmem:[#allocation2 + $0x160] sm:$0xf0] %v599
      %894 = vst [vmem:[#allocation2 + $0x168] sm:$0xf0] %v600
      %895 = vst [vmem:[#allocation2 + $0x170] sm:$0xf0] %v601
      %896 = vst [vmem:[#allocation2 + $0x178] sm:$0xf0] %v598
      %897 = vst [vmem:[#allocation2 + $0x180] sm:$0xf] %v621
      %898 = vst [vmem:[#allocation2 + $0x188] sm:$0xf] %v620
      %899 = vst [vmem:[#allocation2 + $0x190] sm:$0xf] %v619
      %900 = vst [vmem:[#allocation2 + $0x198] sm:$0xf] %v622
      %901 = vst [vmem:[#allocation2 + $0x180] sm:$0xf0] %v645
      %902 = vst [vmem:[#allocation2 + $0x188] sm:$0xf0] %v646
      %903 = vst [vmem:[#allocation2 + $0x190] sm:$0xf0] %v647
      %904 = vst [vmem:[#allocation2 + $0x198] sm:$0xf0] %v644
      %905 = vst [vmem:[#allocation2 + $0x1a0] sm:$0xf] %v667
      %906 = vst [vmem:[#allocation2 + $0x1a8] sm:$0xf] %v666
      %907 = vst [vmem:[#allocation2 + $0x1b0] sm:$0xf] %v665
      %908 = vst [vmem:[#allocation2 + $0x1b8] sm:$0xf] %v668
      %v909 = vld [vmem:[#allocation2] sm:$0xff]
      %v910 = vld [vmem:[#allocation2 + $0x8] sm:$0xff]
      %v911 = vld [vmem:[#allocation2 + $0x10] sm:$0xff]
      %v912 = vld [vmem:[#allocation2 + $0x18] sm:$0xff]
      %v913 = vld [vmem:[#allocation2 + $0x20] sm:$0xff]
      %v914 = vld [vmem:[#allocation2 + $0x28] sm:$0xff]
      %v915 = vld [vmem:[#allocation2 + $0x30] sm:$0xff]
      %v916 = vld [vmem:[#allocation2 + $0x38] sm:$0xff]
      %v917 = vld [vmem:[#allocation2 + $0x40] sm:$0xff]
      %v918 = vld [vmem:[#allocation2 + $0x48] sm:$0xff]
      %v919 = vld [vmem:[#allocation2 + $0x50] sm:$0xff]
      %v920 = vld [vmem:[#allocation2 + $0x58] sm:$0xff]
      %v921 = vld [vmem:[#allocation2 + $0x60] sm:$0xff]
      %v922 = vld [vmem:[#allocation2 + $0x68] sm:$0xff]
      %v923 = vld [vmem:[#allocation2 + $0x70] sm:$0xff]
      %v924 = vld [vmem:[#allocation2 + $0x78] sm:$0xff]
      %v925 = vld [vmem:[#allocation2 + $0x80] sm:$0xff]
      %v926 = vld [vmem:[#allocation2 + $0x88] sm:$0xff]
      %v927 = vld [vmem:[#allocation2 + $0x90] sm:$0xff]
      %v928 = vld [vmem:[#allocation2 + $0x98] sm:$0xff]
      %v929 = vld [vmem:[#allocation2 + $0xa0] sm:$0xff]
      %v930 = vld [vmem:[#allocation2 + $0xa8] sm:$0xff]
      %v931 = vld [vmem:[#allocation2 + $0xb0] sm:$0xff]
      %v932 = vld [vmem:[#allocation2 + $0xb8] sm:$0xff]
      %v933 = vld [vmem:[#allocation2 + $0xc0] sm:$0xff]
      %v934 = vld [vmem:[#allocation2 + $0xc8] sm:$0xff]
      %v935 = vld [vmem:[#allocation2 + $0xd0] sm:$0xff]
      %v936 = vld [vmem:[#allocation2 + $0xd8] sm:$0xff]
      %v937 = vld [vmem:[#allocation2 + $0xe0] sm:$0xff]
      %v938 = vld [vmem:[#allocation2 + $0xe8] sm:$0xff]
      %v939 = vld [vmem:[#allocation2 + $0xf0] sm:$0xff]
      %v940 = vld [vmem:[#allocation2 + $0xf8] sm:$0xff]
      %v941 = vld [vmem:[#allocation2 + $0x100] sm:$0xff]
      %v942 = vld [vmem:[#allocation2 + $0x108] sm:$0xff]
      %v943 = vld [vmem:[#allocation2 + $0x110] sm:$0xff]
      %v944 = vld [vmem:[#allocation2 + $0x118] sm:$0xff]
      %v945 = vld [vmem:[#allocation2 + $0x120] sm:$0xff]
      %v946 = vld [vmem:[#allocation2 + $0x128] sm:$0xff]
      %v947 = vld [vmem:[#allocation2 + $0x130] sm:$0xff]
      %v948 = vld [vmem:[#allocation2 + $0x138] sm:$0xff]
      %v949 = vld [vmem:[#allocation2 + $0x140] sm:$0xff]
      %v950 = vld [vmem:[#allocation2 + $0x148] sm:$0xff]
      %v951 = vld [vmem:[#allocation2 + $0x150] sm:$0xff]
      %v952 = vld [vmem:[#allocation2 + $0x158] sm:$0xff]
      %v953 = vld [vmem:[#allocation2 + $0x160] sm:$0xff]
      %v954 = vld [vmem:[#allocation2 + $0x168] sm:$0xff]
      %v955 = vld [vmem:[#allocation2 + $0x170] sm:$0xff]
      %v956 = vld [vmem:[#allocation2 + $0x178] sm:$0xff]
      %v957 = vld [vmem:[#allocation2 + $0x180] sm:$0xff]
      %v958 = vld [vmem:[#allocation2 + $0x188] sm:$0xff]
      %v959 = vld [vmem:[#allocation2 + $0x190] sm:$0xff]
      %v960 = vld [vmem:[#allocation2 + $0x198] sm:$0xff]
      %v961 = vld [vmem:[#allocation2 + $0x1a0] sm:$0xf]
      %v962 = vld [vmem:[#allocation2 + $0x1a8] sm:$0xf]
      %v963 = vld [vmem:[#allocation2 + $0x1b0] sm:$0xf]
      %v964 = vld [vmem:[#allocation2 + $0x1b8] sm:$0xf]
      %v965 = vld [vmem:[%s1] sm:$0xff]
      %v966 = vld [vmem:[%s1 + $0x8] sm:$0xff]
      %v967 = vld [vmem:[%s1 + $0x10] sm:$0xff]
      %v968 = vld [vmem:[%s1 + $0x18] sm:$0xff]
      %v969 = vld [vmem:[%s1 + $0x20] sm:$0xff]
      %v970 = vld [vmem:[%s1 + $0x28] sm:$0xff]
      %v971 = vld [vmem:[%s1 + $0x30] sm:$0xff]
      %v972 = vld [vmem:[%s1 + $0x38] sm:$0xff]
      %v973 = vld [vmem:[%s1 + $0x40] sm:$0xff]
      %v974 = vld [vmem:[%s1 + $0x48] sm:$0xff]
      %v975 = vld [vmem:[%s1 + $0x50] sm:$0xff]
      %v976 = vld [vmem:[%s1 + $0x58] sm:$0xff]
      %v977 = vld [vmem:[%s1 + $0x60] sm:$0xff]
      %v978 = vld [vmem:[%s1 + $0x68] sm:$0xff]
      %v979 = vld [vmem:[%s1 + $0x70] sm:$0xff]
      %v980 = vld [vmem:[%s1 + $0x78] sm:$0xff]
      %v981 = vld [vmem:[%s1 + $0x80] sm:$0xff]
      %v982 = vld [vmem:[%s1 + $0x88] sm:$0xff]
      %v983 = vld [vmem:[%s1 + $0x90] sm:$0xff]
      %v984 = vld [vmem:[%s1 + $0x98] sm:$0xff]
      %v985 = vld [vmem:[%s1 + $0xa0] sm:$0xff]
      %v986 = vld [vmem:[%s1 + $0xa8] sm:$0xff]
      %v987 = vld [vmem:[%s1 + $0xb0] sm:$0xff]
      %v988 = vld [vmem:[%s1 + $0xb8] sm:$0xff]
      %v989 = vld [vmem:[%s1 + $0xc0] sm:$0xff]
      %v990 = vld [vmem:[%s1 + $0xc8] sm:$0xff]
      %v991 = vld [vmem:[%s1 + $0xd0] sm:$0xff]
      %v992 = vld [vmem:[%s1 + $0xd8] sm:$0xff]
      %v993 = vld [vmem:[%s1 + $0xe0] sm:$0xff]
      %v994 = vld [vmem:[%s1 + $0xe8] sm:$0xff]
      %v995 = vld [vmem:[%s1 + $0xf0] sm:$0xff]
      %v996 = vld [vmem:[%s1 + $0xf8] sm:$0xff]
      %v997 = vld [vmem:[%s1 + $0x100] sm:$0xff]
      %v998 = vld [vmem:[%s1 + $0x108] sm:$0xff]
      %v999 = vld [vmem:[%s1 + $0x110] sm:$0xff]
      %v1000 = vld [vmem:[%s1 + $0x118] sm:$0xff]
      %v1001 = vld [vmem:[%s1 + $0x120] sm:$0xff]
      %v1002 = vld [vmem:[%s1 + $0x128] sm:$0xff]
      %v1003 = vld [vmem:[%s1 + $0x130] sm:$0xff]
      %v1004 = vld [vmem:[%s1 + $0x138] sm:$0xff]
      %v1005 = vld [vmem:[%s1 + $0x140] sm:$0xff]
      %v1006 = vld [vmem:[%s1 + $0x148] sm:$0xff]
      %v1007 = vld [vmem:[%s1 + $0x150] sm:$0xff]
      %v1008 = vld [vmem:[%s1 + $0x158] sm:$0xff]
      %v1009 = vld [vmem:[%s1 + $0x160] sm:$0xff]
      %v1010 = vld [vmem:[%s1 + $0x168] sm:$0xff]
      %v1011 = vld [vmem:[%s1 + $0x170] sm:$0xff]
      %v1012 = vld [vmem:[%s1 + $0x178] sm:$0xff]
      %v1013 = vld [vmem:[%s1 + $0x180] sm:$0xff]
      %v1014 = vld [vmem:[%s1 + $0x188] sm:$0xff]
      %v1015 = vld [vmem:[%s1 + $0x190] sm:$0xff]
      %v1016 = vld [vmem:[%s1 + $0x198] sm:$0xff]
      %v1017 = vld [vmem:[%s1 + $0x1a0] sm:$0xf]
      %v1018 = vld [vmem:[%s1 + $0x1a8] sm:$0xf]
      %v1019 = vld [vmem:[%s1 + $0x1b0] sm:$0xf]
      %v1020 = vld [vmem:[%s1 + $0x1b8] sm:$0xf]
      %v1021 = vmul.f32 %v909, %v965
      %v1022 = vmul.f32 %v910, %v966
      %v1023 = vmul.f32 %v911, %v967
      %v1024 = vmul.f32 %v912, %v968
      %v1025 = vmul.f32 %v913, %v969
      %v1026 = vmul.f32 %v914, %v970
      %v1027 = vmul.f32 %v915, %v971
      %v1028 = vmul.f32 %v916, %v972
      %v1029 = vmul.f32 %v917, %v973
      %v1030 = vmul.f32 %v918, %v974
      %v1031 = vmul.f32 %v919, %v975
      %v1032 = vmul.f32 %v920, %v976
      %v1033 = vmul.f32 %v921, %v977
      %v1034 = vmul.f32 %v922, %v978
      %v1035 = vmul.f32 %v923, %v979
      %v1036 = vmul.f32 %v924, %v980
      %v1037 = vmul.f32 %v925, %v981
      %v1038 = vmul.f32 %v926, %v982
      %v1039 = vmul.f32 %v927, %v983
      %v1040 = vmul.f32 %v928, %v984
      %v1041 = vmul.f32 %v929, %v985
      %v1042 = vmul.f32 %v930, %v986
      %v1043 = vmul.f32 %v931, %v987
      %v1044 = vmul.f32 %v932, %v988
      %v1045 = vmul.f32 %v933, %v989
      %v1046 = vmul.f32 %v934, %v990
      %v1047 = vmul.f32 %v935, %v991
      %v1048 = vmul.f32 %v936, %v992
      %v1049 = vmul.f32 %v937, %v993
      %v1050 = vmul.f32 %v938, %v994
      %v1051 = vmul.f32 %v939, %v995
      %v1052 = vmul.f32 %v940, %v996
      %v1053 = vmul.f32 %v941, %v997
      %v1054 = vmul.f32 %v942, %v998
      %v1055 = vmul.f32 %v943, %v999
      %v1056 = vmul.f32 %v944, %v1000
      %v1057 = vmul.f32 %v945, %v1001
      %v1058 = vmul.f32 %v946, %v1002
      %v1059 = vmul.f32 %v947, %v1003
      %v1060 = vmul.f32 %v948, %v1004
      %v1061 = vmul.f32 %v949, %v1005
      %v1062 = vmul.f32 %v950, %v1006
      %v1063 = vmul.f32 %v951, %v1007
      %v1064 = vmul.f32 %v952, %v1008
      %v1065 = vmul.f32 %v953, %v1009
      %v1066 = vmul.f32 %v954, %v1010
      %v1067 = vmul.f32 %v955, %v1011
      %v1068 = vmul.f32 %v956, %v1012
      %v1069 = vmul.f32 %v957, %v1013
      %v1070 = vmul.f32 %v958, %v1014
      %v1071 = vmul.f32 %v959, %v1015
      %v1072 = vmul.f32 %v960, %v1016
      %v1073 = vmul.f32 %v961, %v1017
      %v1074 = vmul.f32 %v962, %v1018
      %v1075 = vmul.f32 %v963, %v1019
      %v1076 = vmul.f32 %v964, %v1020
      %v1077 = vpack.c.bf16 %v1025, %v1021
      %v1078 = vpack.c.bf16 %v1026, %v1022
      %v1079 = vpack.c.bf16 %v1027, %v1023
      %v1080 = vpack.c.bf16 %v1028, %v1024
      %v1081 = vpack.c.bf16 %v1033, %v1029
      %v1082 = vpack.c.bf16 %v1034, %v1030
      %v1083 = vpack.c.bf16 %v1035, %v1031
      %v1084 = vpack.c.bf16 %v1036, %v1032
      %v1085 = vpack.c.bf16 %v1041, %v1037
      %v1086 = vpack.c.bf16 %v1042, %v1038
      %v1087 = vpack.c.bf16 %v1043, %v1039
      %v1088 = vpack.c.bf16 %v1044, %v1040
      %v1089 = vpack.c.bf16 %v1049, %v1045
      %v1090 = vpack.c.bf16 %v1050, %v1046
      %v1091 = vpack.c.bf16 %v1051, %v1047
      %v1092 = vpack.c.bf16 %v1052, %v1048
      %v1093 = vpack.c.bf16 %v1057, %v1053
      %v1094 = vpack.c.bf16 %v1058, %v1054
      %v1095 = vpack.c.bf16 %v1059, %v1055
      %v1096 = vpack.c.bf16 %v1060, %v1056
      %v1097 = vpack.c.bf16 %v1065, %v1061
      %v1098 = vpack.c.bf16 %v1066, %v1062
      %v1099 = vpack.c.bf16 %v1067, %v1063
      %v1100 = vpack.c.bf16 %v1068, %v1064
      %v1101 = vpack.c.bf16 %v1073, %v1069
      %v1102 = vpack.c.bf16 %v1074, %v1070
      %v1103 = vpack.c.bf16 %v1075, %v1071
      %v1104 = vpack.c.bf16 %v1076, %v1072
      %v1105 = vld [vmem:[%s4] sm:$0x3]
      %v1106 = vld [vmem:[%s5] sm:$0xf]
      %1108 = vset.pattern.permute.xlu0 0
      %1109 = vperm.xlu0 %1108, %v1106
      %v1110 = vpop.permute.xlu0 %1109
      %vm1112 = vcmask 883712
      %v1114 = vsel %vm1112, %v1105, 0
      %vm1116 = vcmask 1045504
      %v1118 = vsel %vm1116, %v1101, 0
      %v1121 = vsel %vm1116, %v1102, 0
      %v1124 = vsel %vm1116, %v1103, 0
      %v1127 = vsel %vm1116, %v1104, 0
      %1129 = vmatprep.subr.bf16.mxu0 0
      %1130 = vmatpush1.bf16.msra.mxu0 0
      %1131 = vmatprep.subr.bf16.mxu0 %v1121
      %1132 = vmatpush1.bf16.msra.mxu0 %v1118
      %1133 = vmatprep.subr.bf16.mxu0 %v1098
      %1134 = vmatpush1.bf16.msra.mxu0 %v1097
      %1135 = vmatprep.subr.bf16.mxu0 %v1094
      %1136 = vmatpush1.bf16.msra.mxu0 %v1093
      %1137 = vmatprep.subr.bf16.mxu0 %v1090
      %1138 = vmatpush1.bf16.msra.mxu0 %v1089
      %1139 = vmatprep.subr.bf16.mxu0 %v1086
      %1140 = vmatpush1.bf16.msra.mxu0 %v1085
      %1141 = vmatprep.subr.bf16.mxu0 %v1082
      %1142 = vmatpush1.bf16.msra.mxu0 %v1081
      %1143 = vmatprep.subr.bf16.mxu0 %v1078
      %1144 = vmatpush1.bf16.msra.mxu0 %v1077
      %1145 = vmatprep.subr.bf16.mxu0 0
      %1146 = vmatpush2.bf16.msra.mxu0 0
      %1147 = vmatprep.subr.bf16.mxu0 0
      %1148 = vmatpush2.bf16.msra.mxu0 0
      %1149 = vmatprep.subr.bf16.mxu0 0
      %1150 = vmatpush2.bf16.msra.mxu0 0
      %1151 = vmatprep.subr.bf16.mxu0 0
      %1152 = vmatpush2.bf16.msra.mxu0 0
      %1153 = vmatprep.subr.bf16.mxu0 0
      %1154 = vmatpush2.bf16.msra.mxu0 0
      %1155 = vmatprep.subr.bf16.mxu0 0
      %1156 = vmatpush2.bf16.msra.mxu0 0
      %1157 = vmatprep.subr.bf16.mxu0 0
      %1158 = vmatpush2.bf16.msra.mxu0 0
      %1159 = vmatprep.subr.bf16.mxu0 0
      %1160 = vmatpush2.bf16.msra.mxu0 0
      %1161 = vmatprep.mubr.bf16.mxu0 0
      %1162 = vmatmul.mubr.bf16.gmra.mxu0 %v1114
      %v1163 = vpop.f32.mrf.mxu0
      %v1164 = vadd.f32 %v1110, %v1163
      %v1165 = vpop.f32.mrf.mxu0
      %v1166 = vadd.f32 %v1110, %v1165
      %v1167 = vpop.f32.mrf.mxu0
      %v1168 = vpop.f32.mrf.mxu0
      %1169 = vdwg.mxu0
      %1170 = vmatprep.subr.bf16.mxu0 0
      %1171 = vmatpush1.bf16.msra.mxu0 0
      %1172 = vmatprep.subr.bf16.mxu0 %v1127
      %1173 = vmatpush1.bf16.msra.mxu0 %v1124
      %1174 = vmatprep.subr.bf16.mxu0 %v1100
      %1175 = vmatpush1.bf16.msra.mxu0 %v1099
      %1176 = vmatprep.subr.bf16.mxu0 %v1096
      %1177 = vmatpush1.bf16.msra.mxu0 %v1095
      %1178 = vmatprep.subr.bf16.mxu0 %v1092
      %1179 = vmatpush1.bf16.msra.mxu0 %v1091
      %1180 = vmatprep.subr.bf16.mxu0 %v1088
      %1181 = vmatpush1.bf16.msra.mxu0 %v1087
      %1182 = vmatprep.subr.bf16.mxu0 %v1084
      %1183 = vmatpush1.bf16.msra.mxu0 %v1083
      %1184 = vmatprep.subr.bf16.mxu0 %v1080
      %1185 = vmatpush1.bf16.msra.mxu0 %v1079
      %1186 = vmatprep.subr.bf16.mxu0 0
      %1187 = vmatpush2.bf16.msra.mxu0 0
      %1188 = vmatprep.subr.bf16.mxu0 0
      %1189 = vmatpush2.bf16.msra.mxu0 0
      %1190 = vmatprep.subr.bf16.mxu0 0
      %1191 = vmatpush2.bf16.msra.mxu0 0
      %1192 = vmatprep.subr.bf16.mxu0 0
      %1193 = vmatpush2.bf16.msra.mxu0 0
      %1194 = vmatprep.subr.bf16.mxu0 0
      %1195 = vmatpush2.bf16.msra.mxu0 0
      %1196 = vmatprep.subr.bf16.mxu0 0
      %1197 = vmatpush2.bf16.msra.mxu0 0
      %1198 = vmatprep.subr.bf16.mxu0 0
      %1199 = vmatpush2.bf16.msra.mxu0 0
      %1200 = vmatprep.subr.bf16.mxu0 0
      %1201 = vmatpush2.bf16.msra.mxu0 0
      %1202 = vmatprep.mubr.bf16.mxu0 0
      %1203 = vmatmul.mubr.bf16.gmra.mxu0 %v1114
      %v1204 = vpop.f32.mrf.mxu0
      %v1205 = vadd.f32 %v1110, %v1204
      %v1206 = vpop.f32.mrf.mxu0
      %v1207 = vadd.f32 %v1110, %v1206
      %v1208 = vpop.f32.mrf.mxu0
      %v1209 = vpop.f32.mrf.mxu0
      %1210 = vdwg.mxu0
      %v1211 = vmax.f32 %v1164, 0.0
      %v1212 = vmax.f32 %v1166, 0.0
      %v1213 = vmax.f32 %v1205, 0.0
      %v1214 = vmax.f32 %v1207, 0.0
      %v1215 = vld [vmem:[%s6] sm:$0xf]
      %v1216 = vld [vmem:[%s6 + $0x4] sm:$0xf]
      %v1217 = vpack.c.bf16 %v1211, %v1211
      %v1218 = vpack.c.bf16 %v1212, %v1212
      %v1219 = vpack.c.bf16 %v1213, %v1213
      %v1220 = vpack.c.bf16 %v1214, %v1214
      %v1221 = vld [vmem:[%s7] sm:$0xff]
      %v1222 = vld [vmem:[%s7 + $0x8] sm:$0xff]
      %1224 = vset.pattern.permute.xlu0 0
      %1225 = vperm.xlu0 %1224, %v1221
      %v1226 = vpop.permute.xlu0 %1225
      %1229 = vset.pattern.permute.xlu0 0
      %1230 = vperm.xlu0 %1229, %v1222
      %v1231 = vpop.permute.xlu0 %1230
      %v1235 = vunpack.c.l.b16 %v1215
      %v1236 = vunpack.c.l.b16 %v1216
      %v1237 = vpack.c.b16 %v1236, %v1235
      %vm1238 = vcmask 31744
      %v1240 = vsel %vm1238, %v1237, 0
      %vm1242 = vcmask 1041408
      %v1244 = vsel %vm1242, %v1217, 0
      %v1247 = vsel %vm1242, %v1218, 0
      %v1250 = vsel %vm1242, %v1219, 0
      %v1253 = vsel %vm1242, %v1220, 0
      %1255 = vmatprep.subr.bf16.mxu0 0
      %1256 = vmatpush1.bf16.msra.mxu0 0
      %1257 = vmatprep.subr.bf16.mxu0 0
      %1258 = vmatpush1.bf16.msra.mxu0 0
      %1259 = vmatprep.subr.bf16.mxu0 0
      %1260 = vmatpush1.bf16.msra.mxu0 0
      %1261 = vmatprep.subr.bf16.mxu0 0
      %1262 = vmatpush1.bf16.msra.mxu0 0
      %1263 = vmatprep.subr.bf16.mxu0 0
      %1264 = vmatpush1.bf16.msra.mxu0 0
      %1265 = vmatprep.subr.bf16.mxu0 0
      %1266 = vmatpush1.bf16.msra.mxu0 0
      %1267 = vmatprep.subr.bf16.mxu0 0
      %1268 = vmatpush1.bf16.msra.mxu0 0
      %1269 = vmatprep.subr.bf16.mxu0 %v1247
      %1270 = vmatpush1.bf16.msra.mxu0 %v1244
      %1271 = vmatprep.subr.bf16.mxu0 0
      %1272 = vmatpush2.bf16.msra.mxu0 0
      %1273 = vmatprep.subr.bf16.mxu0 0
      %1274 = vmatpush2.bf16.msra.mxu0 0
      %1275 = vmatprep.subr.bf16.mxu0 0
      %1276 = vmatpush2.bf16.msra.mxu0 0
      %1277 = vmatprep.subr.bf16.mxu0 0
      %1278 = vmatpush2.bf16.msra.mxu0 0
      %1279 = vmatprep.subr.bf16.mxu0 0
      %1280 = vmatpush2.bf16.msra.mxu0 0
      %1281 = vmatprep.subr.bf16.mxu0 0
      %1282 = vmatpush2.bf16.msra.mxu0 0
      %1283 = vmatprep.subr.bf16.mxu0 0
      %1284 = vmatpush2.bf16.msra.mxu0 0
      %1285 = vmatprep.subr.bf16.mxu0 0
      %1286 = vmatpush2.bf16.msra.mxu0 0
      %1287 = vmatprep.mubr.bf16.mxu0 0
      %1288 = vmatmul.mubr.bf16.gmra.mxu0 %v1240
      %v1289 = vpop.f32.mrf.mxu0
      %v1290 = vadd.f32 %v1226, %v1289
      %v1291 = vpop.f32.mrf.mxu0
      %v1292 = vadd.f32 %v1226, %v1291
      %v1293 = vpop.f32.mrf.mxu0
      %v1294 = vadd.f32 %v1231, %v1293
      %v1295 = vpop.f32.mrf.mxu0
      %v1296 = vadd.f32 %v1231, %v1295
      %1297 = vdwg.mxu0
      %1298 = vmatprep.subr.bf16.mxu0 0
      %1299 = vmatpush1.bf16.msra.mxu0 0
      %1300 = vmatprep.subr.bf16.mxu0 0
      %1301 = vmatpush1.bf16.msra.mxu0 0
      %1302 = vmatprep.subr.bf16.mxu0 0
      %1303 = vmatpush1.bf16.msra.mxu0 0
      %1304 = vmatprep.subr.bf16.mxu0 0
      %1305 = vmatpush1.bf16.msra.mxu0 0
      %1306 = vmatprep.subr.bf16.mxu0 0
      %1307 = vmatpush1.bf16.msra.mxu0 0
      %1308 = vmatprep.subr.bf16.mxu0 0
      %1309 = vmatpush1.bf16.msra.mxu0 0
      %1310 = vmatprep.subr.bf16.mxu0 0
      %1311 = vmatpush1.bf16.msra.mxu0 0
      %1312 = vmatprep.subr.bf16.mxu0 %v1253
      %1313 = vmatpush1.bf16.msra.mxu0 %v1250
      %1314 = vmatprep.subr.bf16.mxu0 0
      %1315 = vmatpush2.bf16.msra.mxu0 0
      %1316 = vmatprep.subr.bf16.mxu0 0
      %1317 = vmatpush2.bf16.msra.mxu0 0
      %1318 = vmatprep.subr.bf16.mxu0 0
      %1319 = vmatpush2.bf16.msra.mxu0 0
      %1320 = vmatprep.subr.bf16.mxu0 0
      %1321 = vmatpush2.bf16.msra.mxu0 0
      %1322 = vmatprep.subr.bf16.mxu0 0
      %1323 = vmatpush2.bf16.msra.mxu0 0
      %1324 = vmatprep.subr.bf16.mxu0 0
      %1325 = vmatpush2.bf16.msra.mxu0 0
      %1326 = vmatprep.subr.bf16.mxu0 0
      %1327 = vmatpush2.bf16.msra.mxu0 0
      %1328 = vmatprep.subr.bf16.mxu0 0
      %1329 = vmatpush2.bf16.msra.mxu0 0
      %1330 = vmatprep.mubr.bf16.mxu0 0
      %1331 = vmatmul.mubr.bf16.gmra.mxu0 %v1240
      %v1332 = vpop.f32.mrf.mxu0
      %v1333 = vadd.f32 %v1226, %v1332
      %v1334 = vpop.f32.mrf.mxu0
      %v1335 = vadd.f32 %v1226, %v1334
      %v1336 = vpop.f32.mrf.mxu0
      %v1337 = vadd.f32 %v1231, %v1336
      %v1338 = vpop.f32.mrf.mxu0
      %v1339 = vadd.f32 %v1231, %v1338
      %1340 = vdwg.mxu0
      %v1341 = vadd.f32 %v1290, %v1292
      %v1342 = vadd.f32 %v1341, %v1333
      %v1343 = vadd.f32 %v1342, %v1335
      %1344 = vadd.xlane.f32.xlu0 %v1343
      %v1345 = vpop.xlane.xlu0 %1344
      %v1346 = vadd.f32 %v1294, %v1296
      %v1347 = vadd.f32 %v1346, %v1337
      %v1348 = vadd.f32 %v1347, %v1339
      %1349 = vadd.xlane.f32.xlu0 %v1348
      %v1350 = vpop.xlane.xlu0 %1349
      %v1351 = vrcp.pop 512.0
      %v1352 = vmul.f32 %v1345, %v1351
      %v1353 = vmul.f32 %v1350, %v1351
      %v1354 = vld [vmem:[%s8] sm:$0xff]
      %v1355 = vld [vmem:[%s8 + $0x8] sm:$0xff]
      %v1356 = vmul.f32 %v1354, %v1352
      %v1357 = vmul.f32 %v1355, %v1353
      %vm1358 = vcmask 7168
      %v1359 = vsel %vm1358, %v1356, 0.0
      %v1360 = vsel %vm1358, %v1357, 0.0
      %v1361 = vadd.f32 %v1359, %v1360
      %v1362 = vrot.slane %v1361, 4
      %v1363 = vadd.f32 %v1361, %v1362
      %v1364 = vrot.slane %v1363, 2
      %v1365 = vadd.f32 %v1363, %v1364
      %v1366 = vrot.slane %v1365, 1
      %v1367 = vadd.f32 %v1365, %v1366
      %v1368 = vmax.f32 %v1367, 0.0
      %v1369 = vld [vmem:[%s9] sm:$0xff]
      %v1370 = vld [vmem:[%s9 + $0x8] sm:$0xff]
      %v1371 = vmul.f32 %v1369, %v1368
      %v1372 = vmul.f32 %v1370, %v1368
      %v1373 = vadd.f32 %v1371, 0.0
      %v1374 = vadd.f32 %v1372, 0.0
      %v1375 = vxor.u32 %v1373, 2147483648
      %v1376 = vxor.u32 %v1374, 2147483648
      %v1377 = vmul.f32 %v1375, 1.442695
      %v1378 = vpow.pop %v1377
      %v1379 = vmul.f32 %v1376, 1.442695
      %v1380 = vpow.pop %v1379
      %v1381 = vadd.f32 %v1378, 1.0
      %v1382 = vadd.f32 %v1380, 1.0
      %v1383 = vrcp.pop %v1381
      %v1384 = vmul.f32 1.0, %v1383
      %v1385 = vrcp.pop %v1382
      %v1386 = vmul.f32 1.0, %v1385
      %1388 = vset.pattern.permute.xlu0 0
      %1389 = vperm.xlu0 %1388, %v1384
      %v1390 = vpop.permute.xlu0 %1389
      %1393 = vset.pattern.permute.xlu0 0
      %1394 = vperm.xlu0 %1393, %v1386
      %v1395 = vpop.permute.xlu0 %1394
      %v1397 = vmul.f32 %v1290, %v1390
      %v1398 = vmul.f32 %v1292, %v1390
      %v1399 = vmul.f32 %v1333, %v1390
      %v1400 = vmul.f32 %v1335, %v1390
      %v1401 = vmul.f32 %v1294, %v1395
      %v1402 = vmul.f32 %v1296, %v1395
      %v1403 = vmul.f32 %v1337, %v1395
      %v1404 = vmul.f32 %v1339, %v1395
      %v1405 = vadd.f32 %v1397, %v361
      %v1406 = vadd.f32 %v1398, %v362
      %v1407 = vadd.f32 %v1399, %v363
      %v1408 = vadd.f32 %v1400, %v364
      %v1409 = vadd.f32 %v1401, %v365
      %v1410 = vadd.f32 %v1402, %v366
      %v1411 = vadd.f32 %v1403, %v367
      %v1412 = vadd.f32 %v1404, %v368
      %v1413 = vmax.f32 %v1405, 0.0
      %v1414 = vmax.f32 %v1406, 0.0
      %v1415 = vmax.f32 %v1407, 0.0
      %v1416 = vmax.f32 %v1408, 0.0
      %v1417 = vmax.f32 %v1409, 0.0
      %v1418 = vmax.f32 %v1410, 0.0
      %v1419 = vmax.f32 %v1411, 0.0
      %v1420 = vmax.f32 %v1412, 0.0
      %1421 = vst [vmem:[%s359] sm:$0xff] %v1413
      %1422 = vst [vmem:[%s359 + $0x8] sm:$0xff] %v1414
      %1423 = vst [vmem:[%s359 + $0x10] sm:$0xff] %v1415
      %1424 = vst [vmem:[%s359 + $0x18] sm:$0xff] %v1416
      %1425 = vst [vmem:[%s359 + $0x20] sm:$0xff] %v1417
      %1426 = vst [vmem:[%s359 + $0x28] sm:$0xff] %v1418
      %1427 = vst [vmem:[%s359 + $0x30] sm:$0xff] %v1419
      %1428 = vst [vmem:[%s359 + $0x38] sm:$0xff] %v1420
      %p1429 = scmp.lt.s32.totalorder %s21, 1
      %s1430 = scalar_select %p1429, %s21, 1
      %s1431 = smul.addr %s1430, 8
      %s1432 = smul.addr %s1431, 8
      %s1433 = scalar_lea.vmem %s10, %s1432
      // Predicated region
      $region61: #{se_bottleneck_forward.1} parent=59 // pred_check
        %p1434 = pneg %p254
      $region62: #{se_bottleneck_forward.1} parent=59 // pred_check_branch
        %1436 = sbr.rel (%p1434) target = $region64
      $region63: #{se_bottleneck_forward.1} parent=59 // pred_region
        _
      $region64: #{se_bottleneck_forward.1} parent=59 // pred_fallthru
        _
    $region60: #{se_bottleneck_forward.1} parent=5 // pred_fallthru
      _
    %p1437 = scmp.le.s32.totalorder 2, %s16
    // Predicated region
    $region65: #{se_bottleneck_forward.1} parent=5 // pred_check
      %p1438 = pneg %p1437
    $region66: #{se_bottleneck_forward.1} parent=5 // pred_check_branch
      %1440 = sbr.rel (%p1438) target = $region68
    $region67: #{se_bottleneck_forward.1} parent=5 // pred_region
      %s1441 = ssub.s32 %s16, 2
      // Predicated region
      $region69: #{se_bottleneck_forward.1} parent=67 // pred_check
        %p1442 = pneg %p260
      $region70: #{se_bottleneck_forward.1} parent=67 // pred_check_branch
        %1444 = sbr.rel (%p1442) target = $region72
      $region71: #{se_bottleneck_forward.1} parent=67 // pred_region
        %p1445 = scmp.lt.s32.totalorder %s22, 1
        %s1446 = scalar_select %p1445, %s22, 1
        %s1447 = smul.addr %s1446, 8
        %s1448 = smul.addr %s1447, 8
        %s1449 = scalar_lea.vmem %s10, %s1448
      $region72: #{se_bottleneck_forward.1} parent=67 // pred_fallthru
        _
    $region68: #{se_bottleneck_forward.1} parent=5 // pred_fallthru
      _
  $region6: #{se_bottleneck_forward.1} parent=0 // loop_footer
    %s20 = sadd.s32 1, %s16
  $region7: #{se_bottleneck_forward.1} parent=0 // loop_footer_branch
    %15 = sbr.rel target = $region3
  $region8: #{se_bottleneck_forward.1} parent=0 // loop_exit
    _

</llo_original>
